<compile_context>
chip_gen: v6e
topology: v6e:2x2x1
jax: 0.10.0
libtpu: 0.0.40
codegen_flags: <defaults>
</compile_context>

<pallas_src>
import jax
import jax.numpy as jnp
from jax.experimental import pallas as pl
from jax.experimental.pallas import tpu as pltpu


# ---------------------------------------------------------------------------
# helpers
# ---------------------------------------------------------------------------
_ADJ_TILE_BUDGET = 4 * 1024 * 1024  # bytes of bf16 adjacency per grid step


def _pick_bt(B, N):
    """Largest divisor of B whose (Bt, N, N) bf16 adjacency tile fits the budget."""
    for bt in range(B, 0, -1):
        if B % bt == 0 and bt * N * N * 2 <= _ADJ_TILE_BUDGET:
            return bt
    return 1


def _bn_fold(y, gamma, beta, eps):
    """Training-mode BatchNorm1d folded into per-channel (scale, shift).

    Stats over (batch, node) per channel with biased variance, matching
    nn.BatchNorm1d applied to the permuted (B, C, N) tensor in training mode.
    It is only a (C,)-sized reduction, so plain XLA is used (per review).
    """
    mean = jnp.mean(y, axis=(0, 1))
    var = jnp.var(y, axis=(0, 1))  # biased variance, like PyTorch normalization
    scale = gamma * jax.lax.rsqrt(var + eps)
    shift = beta - mean * scale
    C = y.shape[-1]
    return (scale.reshape(1, C).astype(jnp.float32),
            shift.reshape(1, C).astype(jnp.float32))


def _rep_spec(shape):
    """Whole-array block, replicated across the batch grid."""
    nz = (0,) * len(shape)
    return pl.BlockSpec(tuple(shape), lambda i, _nz=nz: _nz)


# ---------------------------------------------------------------------------
# kernels
# ---------------------------------------------------------------------------
def _conv_head(h, w_ref, b_ref):
    """(Bt, N, Cin) f32 -> relu((Bt*N, Cin) @ W + b) -> (Bt, N, Cout) f32."""
    Bt, N, Cin = h.shape
    hf = h.reshape(Bt * N, Cin).astype(jnp.bfloat16)
    y = jnp.dot(hf, w_ref[...], preferred_element_type=jnp.float32) + b_ref[...]
    return jnp.maximum(y, 0.0).reshape(Bt, N, -1)


def _layer1_dual_kernel(adj_ref, x_ref, we_ref, be_ref, wa_ref, ba_ref,
                        oe_ref, oa_ref):
    # Layer 1 of both branches: shared input x, shared adj @ x.
    adj = adj_ref[...]                                            # (Bt, N, N) bf16
    x = x_ref[...]                                                # (Bt, N, Cin) f32
    h = jnp.einsum('bij,bjf->bif', adj, x.astype(jnp.bfloat16),
                   preferred_element_type=jnp.float32) + x
    oe_ref[...] = _conv_head(h, we_ref, be_ref)
    oa_ref[...] = _conv_head(h, wa_ref, ba_ref)


def _layer_dual_kernel(adj_ref, xe_ref, xa_ref,
                       sce_ref, she_ref, sca_ref, sha_ref,
                       we_ref, be_ref, wa_ref, ba_ref,
                       oe_ref, oa_ref):
    # Layer i>1 of both branches. The previous layer's BatchNorm is applied here
    # as a scale/shift prologue; the adjacency tile is loaded once for both.
    adj = adj_ref[...]                                            # (Bt, N, N) bf16
    xe = xe_ref[...] * sce_ref[...] + she_ref[...]                # BN apply (f32)
    xa = xa_ref[...] * sca_ref[...] + sha_ref[...]
    he = jnp.einsum('bij,bjf->bif', adj, xe.astype(jnp.bfloat16),
                    preferred_element_type=jnp.float32) + xe
    ha = jnp.einsum('bij,bjf->bif', adj, xa.astype(jnp.bfloat16),
                    preferred_element_type=jnp.float32) + xa
    oe_ref[...] = _conv_head(he, we_ref, be_ref)
    oa_ref[...] = _conv_head(ha, wa_ref, ba_ref)


def _bn_softmax_pool_kernel(emb_ref, assign_ref,
                            sce_ref, she_ref, sca_ref, sha_ref,
                            soft_ref, pool_ref):
    # Final BNs of both branches + softmax over clusters + pooled s^T @ emb.
    emb = emb_ref[...] * sce_ref[...] + she_ref[...]              # (Bt, N, D)
    a = assign_ref[...] * sca_ref[...] + sha_ref[...]             # (Bt, N, K)
    m = jnp.max(a, axis=-1, keepdims=True)
    e = jnp.exp(a - m)
    s = e * pl.reciprocal(jnp.sum(e, axis=-1, keepdims=True), approx=True)
    soft_ref[...] = s
    # Contract over the node axis directly -- no explicit transpose / relayout.
    pool_ref[...] = jnp.einsum('bnk,bnd->bkd',
                               s.astype(jnp.bfloat16), emb.astype(jnp.bfloat16),
                               preferred_element_type=jnp.float32)


# ---------------------------------------------------------------------------
# pallas_call wrappers
# ---------------------------------------------------------------------------
def dual_layer1(adj_bf16, x, w_e, b_e, w_a, b_a):
    B, N, Cin = x.shape
    Ce, Ca = w_e.shape[1], w_a.shape[1]
    bt = _pick_bt(B, N)
    batch3 = lambda tail: pl.BlockSpec((bt,) + tail, lambda i: (i, 0, 0))
    return pl.pallas_call(
        _layer1_dual_kernel,
        out_shape=(jax.ShapeDtypeStruct((B, N, Ce), jnp.float32),
                   jax.ShapeDtypeStruct((B, N, Ca), jnp.float32)),
        grid=(B // bt,),
        in_specs=[
            batch3((N, N)),
            batch3((N, Cin)),
            _rep_spec((Cin, Ce)), _rep_spec((1, Ce)),
            _rep_spec((Cin, Ca)), _rep_spec((1, Ca)),
        ],
        out_specs=(batch3((N, Ce)), batch3((N, Ca))),
        compiler_params=pltpu.CompilerParams(dimension_semantics=("parallel",)),
    )(adj_bf16, x,
      w_e.astype(jnp.bfloat16), b_e.reshape(1, Ce),
      w_a.astype(jnp.bfloat16), b_a.reshape(1, Ca))


def dual_layer(adj_bf16, x_e, x_a, scale_e, shift_e, scale_a, shift_a,
               w_e, b_e, w_a, b_a):
    B, N, Ce_in = x_e.shape
    Ca_in = x_a.shape[-1]
    Ce, Ca = w_e.shape[1], w_a.shape[1]
    bt = _pick_bt(B, N)
    batch3 = lambda tail: pl.BlockSpec((bt,) + tail, lambda i: (i, 0, 0))
    return pl.pallas_call(
        _layer_dual_kernel,
        out_shape=(jax.ShapeDtypeStruct((B, N, Ce), jnp.float32),
                   jax.ShapeDtypeStruct((B, N, Ca), jnp.float32)),
        grid=(B // bt,),
        in_specs=[
            batch3((N, N)),
            batch3((N, Ce_in)),
            batch3((N, Ca_in)),
            _rep_spec((1, Ce_in)), _rep_spec((1, Ce_in)),
            _rep_spec((1, Ca_in)), _rep_spec((1, Ca_in)),
            _rep_spec((Ce_in, Ce)), _rep_spec((1, Ce)),
            _rep_spec((Ca_in, Ca)), _rep_spec((1, Ca)),
        ],
        out_specs=(batch3((N, Ce)), batch3((N, Ca))),
        compiler_params=pltpu.CompilerParams(dimension_semantics=("parallel",)),
    )(adj_bf16, x_e, x_a, scale_e, shift_e, scale_a, shift_a,
      w_e.astype(jnp.bfloat16), b_e.reshape(1, Ce),
      w_a.astype(jnp.bfloat16), b_a.reshape(1, Ca))


def bn_softmax_pool(emb_raw, assign_raw, scale_e, shift_e, scale_a, shift_a):
    B, N, D = emb_raw.shape
    K = assign_raw.shape[-1]
    bt = _pick_bt(B, N)
    batch3 = lambda tail: pl.BlockSpec((bt,) + tail, lambda i: (i, 0, 0))
    return pl.pallas_call(
        _bn_softmax_pool_kernel,
        out_shape=(jax.ShapeDtypeStruct((B, N, K), jnp.float32),
                   jax.ShapeDtypeStruct((B, K, D), jnp.float32)),
        grid=(B // bt,),
        in_specs=[
            batch3((N, D)),
            batch3((N, K)),
            _rep_spec((1, D)), _rep_spec((1, D)),
            _rep_spec((1, K)), _rep_spec((1, K)),
        ],
        out_specs=(batch3((N, K)), batch3((K, D))),
        compiler_params=pltpu.CompilerParams(dimension_semantics=("parallel",)),
    )(emb_raw, assign_raw, scale_e, shift_e, scale_a, shift_a)


# ---------------------------------------------------------------------------
# parameter init + model glue
# ---------------------------------------------------------------------------
def init_gcn_params(key, in_dim, hid_dim, out_dim, num_gc_layers):
    if num_gc_layers == 1:
        dims = [(in_dim, out_dim)]
    else:
        dims = [(in_dim, hid_dim)]
        dims += [(hid_dim, hid_dim)] * (num_gc_layers - 2)
        dims += [(hid_dim, out_dim)]
    params = []
    for ci, co in dims:
        key, kw, kb = jax.random.split(key, 3)
        w = jax.random.normal(kw, (ci, co), jnp.float32) * (1.0 / jnp.sqrt(ci))
        b = jax.random.normal(kb, (co,), jnp.float32) * 0.01
        gamma = jnp.ones((co,), jnp.float32)
        beta = jnp.zeros((co,), jnp.float32)
        params.append((w, b, gamma, beta))
    return params


def soft_clustering_forward(emb_params, assign_params, x, adj, eps=1e-5):
    assert len(emb_params) == len(assign_params)
    adj_bf = adj.astype(jnp.bfloat16)   # dominant HBM traffic -> bf16 once

    (we, be, ge, bte) = emb_params[0]
    (wa, ba, ga, bta) = assign_params[0]
    y_e, y_a = dual_layer1(adj_bf, x, we, be, wa, ba)
    sc_e, sh_e = _bn_fold(y_e, ge, bte, eps)
    sc_a, sh_a = _bn_fold(y_a, ga, bta, eps)

    for layer in range(1, len(emb_params)):
        (we, be, ge, bte) = emb_params[layer]
        (wa, ba, ga, bta) = assign_params[layer]
        y_e, y_a = dual_layer(adj_bf, y_e, y_a, sc_e, sh_e, sc_a, sh_a,
                              we, be, wa, ba)
        sc_e, sh_e = _bn_fold(y_e, ge, bte, eps)
        sc_a, sh_a = _bn_fold(y_a, ga, bta, eps)

    embedding_h, substr_tensor = bn_softmax_pool(y_e, y_a, sc_e, sh_e, sc_a, sh_a)
    return embedding_h, substr_tensor


if __name__ == "__main__":
    num_gcn_layer = 2
    B, N = 2, 16
    in_dim, hid1_dim, hid2_dim, cluster_dim = 8, 32, 16, 8

    key = jax.random.PRNGKey(0)
    k_x, k_adj, k_emb, k_assign = jax.random.split(key, 4)

    x = jax.random.normal(k_x, (B, N, in_dim), jnp.float32)
    adj = jax.random.uniform(k_adj, (B, N, N), jnp.float32)

    emb_params = init_gcn_params(k_emb, in_dim, hid1_dim, hid2_dim, num_gcn_layer)
    assign_params = init_gcn_params(k_assign, in_dim, hid2_dim, cluster_dim,
                                    num_gcn_layer)

    fwd = jax.jit(soft_clustering_forward)
    embedding_h, substr_tensor = fwd(emb_params, assign_params, x, adj)
    jax.block_until_ready((embedding_h, substr_tensor))

    assert embedding_h.shape == (B, N, cluster_dim)
    assert substr_tensor.shape == (B, cluster_dim, hid2_dim)
    assert bool(jnp.all(jnp.isfinite(embedding_h)))
    assert bool(jnp.all(jnp.isfinite(substr_tensor)))
    print("KERNEL_OK")
</pallas_src>

<mosaic_0001>
module attributes {stable_mosaic.version = 11 : i64} {
  func.func @_layer1_dual_kernel(%arg0: i32, %arg1: memref<2x16x16xbf16, #tpu.memory_space<vmem>>, %arg2: memref<2x16x8xf32, #tpu.memory_space<vmem>>, %arg3: memref<8x32xbf16, #tpu.memory_space<vmem>>, %arg4: memref<1x32xf32, #tpu.memory_space<vmem>>, %arg5: memref<8x16xbf16, #tpu.memory_space<vmem>>, %arg6: memref<1x16xf32, #tpu.memory_space<vmem>>, %arg7: memref<2x16x32xf32, #tpu.memory_space<vmem>>, %arg8: memref<2x16x16xf32, #tpu.memory_space<vmem>>) attributes {dimension_semantics = [#tpu.dimension_semantics<parallel>], iteration_bounds = array<i64: 1>, scalar_prefetch = 0 : i64, scratch_operands = 0 : i64, tpu.core_type = #tpu.core_type<tc>, window_params = [{transform_indices = @transform_0, window_bounds = array<i64: 2, 16, 16>}, {transform_indices = @transform_1, window_bounds = array<i64: 2, 16, 8>}, {pipeline_mode = #tpu.pipeline_mode<synchronous>, transform_indices = @transform_2, window_bounds = array<i64: 8, 32>}, {pipeline_mode = #tpu.pipeline_mode<synchronous>, transform_indices = @transform_3, window_bounds = array<i64: 1, 32>}, {pipeline_mode = #tpu.pipeline_mode<synchronous>, transform_indices = @transform_4, window_bounds = array<i64: 8, 16>}, {pipeline_mode = #tpu.pipeline_mode<synchronous>, transform_indices = @transform_5, window_bounds = array<i64: 1, 16>}, {transform_indices = @transform_6, window_bounds = array<i64: 2, 16, 32>}, {transform_indices = @transform_7, window_bounds = array<i64: 2, 16, 16>}]} {
    %c0 = arith.constant 0 : index
    %c0_0 = arith.constant 0 : index
    %c0_1 = arith.constant 0 : index
    %0 = vector.load %arg1[%c0, %c0_0, %c0_1] : memref<2x16x16xbf16, #tpu.memory_space<vmem>>, vector<2x16x16xbf16>
    %c0_2 = arith.constant 0 : index
    %c0_3 = arith.constant 0 : index
    %c0_4 = arith.constant 0 : index
    %1 = vector.load %arg2[%c0_2, %c0_3, %c0_4] : memref<2x16x8xf32, #tpu.memory_space<vmem>>, vector<2x16x8xf32>
    %2 = arith.truncf %1 : vector<2x16x8xf32> to vector<2x16x8xbf16>
    "tpu.trace_start"() <{level = 10 : i32, message = "bij,bjf->bif"}> : () -> ()
    %cst = arith.constant dense<0.000000e+00> : vector<2x16x8xf32>
    %3 = tpu.matmul %0, %2, %cst {dimension_numbers = #tpu.dot_dimension_numbers<[2], [1], [1], [2], [0, 0, 0, 1, 1, 2], [0], [0]>} : vector<2x16x16xbf16>, vector<2x16x8xbf16>, vector<2x16x8xf32> -> vector<2x16x8xf32>
    "tpu.trace_stop"() : () -> ()
    %4 = arith.addf %3, %1 : vector<2x16x8xf32>
    %5 = vector.shape_cast %4 : vector<2x16x8xf32> to vector<32x8xf32>
    %6 = arith.truncf %5 : vector<32x8xf32> to vector<32x8xbf16>
    %c0_5 = arith.constant 0 : index
    %c0_6 = arith.constant 0 : index
    %7 = vector.load %arg3[%c0_5, %c0_6] : memref<8x32xbf16, #tpu.memory_space<vmem>>, vector<8x32xbf16>
    %cst_7 = arith.constant dense<0.000000e+00> : vector<32x32xf32>
    %8 = tpu.matmul %6, %7, %cst_7 {dimension_numbers = #tpu.dot_dimension_numbers<[1], [0], [0], [1], [0, 0, 1, 1], [], []>} : vector<32x8xbf16>, vector<8x32xbf16>, vector<32x32xf32> -> vector<32x32xf32>
    %c0_8 = arith.constant 0 : index
    %c0_9 = arith.constant 0 : index
    %9 = vector.load %arg4[%c0_8, %c0_9] : memref<1x32xf32, #tpu.memory_space<vmem>>, vector<1x32xf32>
    %10 = vector.broadcast %9 : vector<1x32xf32> to vector<32x32xf32>
    %11 = arith.addf %8, %10 : vector<32x32xf32>
    %cst_10 = arith.constant 0.000000e+00 : f32
    %12 = vector.broadcast %cst_10 : f32 to vector<32x32xf32>
    %13 = arith.maximumf %11, %12 : vector<32x32xf32>
    %14 = vector.shape_cast %13 : vector<32x32xf32> to vector<2x16x32xf32>
    %c0_11 = arith.constant 0 : index
    %c0_12 = arith.constant 0 : index
    %c0_13 = arith.constant 0 : index
    %15 = vector.load %arg7[%c0_11, %c0_12, %c0_13] : memref<2x16x32xf32, #tpu.memory_space<vmem>>, vector<2x16x32xf32>
    tpu.vector_store %arg7[%c0_11, %c0_12, %c0_13], %14 {strides = array<i32>} : memref<2x16x32xf32, #tpu.memory_space<vmem>>, vector<2x16x32xf32>,
    %16 = vector.shape_cast %4 : vector<2x16x8xf32> to vector<32x8xf32>
    %17 = arith.truncf %16 : vector<32x8xf32> to vector<32x8xbf16>
    %c0_14 = arith.constant 0 : index
    %c0_15 = arith.constant 0 : index
    %18 = vector.load %arg5[%c0_14, %c0_15] : memref<8x16xbf16, #tpu.memory_space<vmem>>, vector<8x16xbf16>
    %cst_16 = arith.constant dense<0.000000e+00> : vector<32x16xf32>
    %19 = tpu.matmul %17, %18, %cst_16 {dimension_numbers = #tpu.dot_dimension_numbers<[1], [0], [0], [1], [0, 0, 1, 1], [], []>} : vector<32x8xbf16>, vector<8x16xbf16>, vector<32x16xf32> -> vector<32x16xf32>
    %c0_17 = arith.constant 0 : index
    %c0_18 = arith.constant 0 : index
    %20 = vector.load %arg6[%c0_17, %c0_18] : memref<1x16xf32, #tpu.memory_space<vmem>>, vector<1x16xf32>
    %21 = vector.broadcast %20 : vector<1x16xf32> to vector<32x16xf32>
    %22 = arith.addf %19, %21 : vector<32x16xf32>
    %cst_19 = arith.constant 0.000000e+00 : f32
    %23 = vector.broadcast %cst_19 : f32 to vector<32x16xf32>
    %24 = arith.maximumf %22, %23 : vector<32x16xf32>
    %25 = vector.shape_cast %24 : vector<32x16xf32> to vector<2x16x16xf32>
    %c0_20 = arith.constant 0 : index
    %c0_21 = arith.constant 0 : index
    %c0_22 = arith.constant 0 : index
    %26 = vector.load %arg8[%c0_20, %c0_21, %c0_22] : memref<2x16x16xf32, #tpu.memory_space<vmem>>, vector<2x16x16xf32>
    tpu.vector_store %arg8[%c0_20, %c0_21, %c0_22], %25 {strides = array<i32>} : memref<2x16x16xf32, #tpu.memory_space<vmem>>, vector<2x16x16xf32>,
    return
  }
  func.func @transform_0(%arg0: i32) -> (i32, i32, i32) {
    %c0_i32 = arith.constant 0 : i32
    %c0_i32_0 = arith.constant 0 : i32
    %c0_i32_1 = arith.constant 0 : i32
    return %arg0, %c0_i32, %c0_i32_0 : i32, i32, i32
  }
  func.func @transform_1(%arg0: i32) -> (i32, i32, i32) {
    %c0_i32 = arith.constant 0 : i32
    %c0_i32_0 = arith.constant 0 : i32
    %c0_i32_1 = arith.constant 0 : i32
    return %arg0, %c0_i32, %c0_i32_0 : i32, i32, i32
  }
  func.func @transform_2(%arg0: i32) -> (i32, i32) {
    %c0_i32 = arith.constant 0 : i32
    %c0_i32_0 = arith.constant 0 : i32
    %c0_i32_1 = arith.constant 0 : i32
    return %c0_i32, %c0_i32_0 : i32, i32
  }
  func.func @transform_3(%arg0: i32) -> (i32, i32) {
    %c0_i32 = arith.constant 0 : i32
    %c0_i32_0 = arith.constant 0 : i32
    %c0_i32_1 = arith.constant 0 : i32
    return %c0_i32, %c0_i32_0 : i32, i32
  }
  func.func @transform_4(%arg0: i32) -> (i32, i32) {
    %c0_i32 = arith.constant 0 : i32
    %c0_i32_0 = arith.constant 0 : i32
    %c0_i32_1 = arith.constant 0 : i32
    return %c0_i32, %c0_i32_0 : i32, i32
  }
  func.func @transform_5(%arg0: i32) -> (i32, i32) {
    %c0_i32 = arith.constant 0 : i32
    %c0_i32_0 = arith.constant 0 : i32
    %c0_i32_1 = arith.constant 0 : i32
    return %c0_i32, %c0_i32_0 : i32, i32
  }
  func.func @transform_6(%arg0: i32) -> (i32, i32, i32) {
    %c0_i32 = arith.constant 0 : i32
    %c0_i32_0 = arith.constant 0 : i32
    %c0_i32_1 = arith.constant 0 : i32
    return %arg0, %c0_i32, %c0_i32_0 : i32, i32, i32
  }
  func.func @transform_7(%arg0: i32) -> (i32, i32, i32) {
    %c0_i32 = arith.constant 0 : i32
    %c0_i32_0 = arith.constant 0 : i32
    %c0_i32_1 = arith.constant 0 : i32
    return %arg0, %c0_i32, %c0_i32_0 : i32, i32, i32
  }
}

module attributes {stable_mosaic.version = 11 : i64} {
  func.func @_layer_dual_kernel(%arg0: i32, %arg1: memref<2x16x16xbf16, #tpu.memory_space<vmem>>, %arg2: memref<2x16x32xf32, #tpu.memory_space<vmem>>, %arg3: memref<2x16x16xf32, #tpu.memory_space<vmem>>, %arg4: memref<1x32xf32, #tpu.memory_space<vmem>>, %arg5: memref<1x32xf32, #tpu.memory_space<vmem>>, %arg6: memref<1x16xf32, #tpu.memory_space<vmem>>, %arg7: memref<1x16xf32, #tpu.memory_space<vmem>>, %arg8: memref<32x16xbf16, #tpu.memory_space<vmem>>, %arg9: memref<1x16xf32, #tpu.memory_space<vmem>>, %arg10: memref<16x8xbf16, #tpu.memory_space<vmem>>, %arg11: memref<1x8xf32, #tpu.memory_space<vmem>>, %arg12: memref<2x16x16xf32, #tpu.memory_space<vmem>>, %arg13: memref<2x16x8xf32, #tpu.memory_space<vmem>>) attributes {dimension_semantics = [#tpu.dimension_semantics<parallel>], iteration_bounds = array<i64: 1>, scalar_prefetch = 0 : i64, scratch_operands = 0 : i64, tpu.core_type = #tpu.core_type<tc>, window_params = [{transform_indices = @transform_0, window_bounds = array<i64: 2, 16, 16>}, {transform_indices = @transform_1, window_bounds = array<i64: 2, 16, 32>}, {transform_indices = @transform_2, window_bounds = array<i64: 2, 16, 16>}, {pipeline_mode = #tpu.pipeline_mode<synchronous>, transform_indices = @transform_3, window_bounds = array<i64: 1, 32>}, {pipeline_mode = #tpu.pipeline_mode<synchronous>, transform_indices = @transform_4, window_bounds = array<i64: 1, 32>}, {pipeline_mode = #tpu.pipeline_mode<synchronous>, transform_indices = @transform_5, window_bounds = array<i64: 1, 16>}, {pipeline_mode = #tpu.pipeline_mode<synchronous>, transform_indices = @transform_6, window_bounds = array<i64: 1, 16>}, {pipeline_mode = #tpu.pipeline_mode<synchronous>, transform_indices = @transform_7, window_bounds = array<i64: 32, 16>}, {pipeline_mode = #tpu.pipeline_mode<synchronous>, transform_indices = @transform_8, window_bounds = array<i64: 1, 16>}, {pipeline_mode = #tpu.pipeline_mode<synchronous>, transform_indices = @transform_9, window_bounds = array<i64: 16, 8>}, {pipeline_mode = #tpu.pipeline_mode<synchronous>, transform_indices = @transform_10, window_bounds = array<i64: 1, 8>}, {transform_indices = @transform_11, window_bounds = array<i64: 2, 16, 16>}, {transform_indices = @transform_12, window_bounds = array<i64: 2, 16, 8>}]} {
    %c0 = arith.constant 0 : index
    %c0_0 = arith.constant 0 : index
    %c0_1 = arith.constant 0 : index
    %0 = vector.load %arg1[%c0, %c0_0, %c0_1] : memref<2x16x16xbf16, #tpu.memory_space<vmem>>, vector<2x16x16xbf16>
    %c0_2 = arith.constant 0 : index
    %c0_3 = arith.constant 0 : index
    %c0_4 = arith.constant 0 : index
    %1 = vector.load %arg2[%c0_2, %c0_3, %c0_4] : memref<2x16x32xf32, #tpu.memory_space<vmem>>, vector<2x16x32xf32>
    %c0_5 = arith.constant 0 : index
    %c0_6 = arith.constant 0 : index
    %2 = vector.load %arg4[%c0_5, %c0_6] : memref<1x32xf32, #tpu.memory_space<vmem>>, vector<1x32xf32>
    %3 = vector.shape_cast %2 : vector<1x32xf32> to vector<1x1x32xf32>
    %4 = vector.broadcast %3 : vector<1x1x32xf32> to vector<2x16x32xf32>
    %5 = arith.mulf %1, %4 : vector<2x16x32xf32>
    %c0_7 = arith.constant 0 : index
    %c0_8 = arith.constant 0 : index
    %6 = vector.load %arg5[%c0_7, %c0_8] : memref<1x32xf32, #tpu.memory_space<vmem>>, vector<1x32xf32>
    %7 = vector.shape_cast %6 : vector<1x32xf32> to vector<1x1x32xf32>
    %8 = vector.broadcast %7 : vector<1x1x32xf32> to vector<2x16x32xf32>
    %9 = arith.addf %5, %8 : vector<2x16x32xf32>
    %c0_9 = arith.constant 0 : index
    %c0_10 = arith.constant 0 : index
    %c0_11 = arith.constant 0 : index
    %10 = vector.load %arg3[%c0_9, %c0_10, %c0_11] : memref<2x16x16xf32, #tpu.memory_space<vmem>>, vector<2x16x16xf32>
    %c0_12 = arith.constant 0 : index
    %c0_13 = arith.constant 0 : index
    %11 = vector.load %arg6[%c0_12, %c0_13] : memref<1x16xf32, #tpu.memory_space<vmem>>, vector<1x16xf32>
    %12 = vector.shape_cast %11 : vector<1x16xf32> to vector<1x1x16xf32>
    %13 = vector.broadcast %12 : vector<1x1x16xf32> to vector<2x16x16xf32>
    %14 = arith.mulf %10, %13 : vector<2x16x16xf32>
    %c0_14 = arith.constant 0 : index
    %c0_15 = arith.constant 0 : index
    %15 = vector.load %arg7[%c0_14, %c0_15] : memref<1x16xf32, #tpu.memory_space<vmem>>, vector<1x16xf32>
    %16 = vector.shape_cast %15 : vector<1x16xf32> to vector<1x1x16xf32>
    %17 = vector.broadcast %16 : vector<1x1x16xf32> to vector<2x16x16xf32>
    %18 = arith.addf %14, %17 : vector<2x16x16xf32>
    %19 = arith.truncf %9 : vector<2x16x32xf32> to vector<2x16x32xbf16>
    "tpu.trace_start"() <{level = 10 : i32, message = "bij,bjf->bif"}> : () -> ()
    %cst = arith.constant dense<0.000000e+00> : vector<2x16x32xf32>
    %20 = tpu.matmul %0, %19, %cst {dimension_numbers = #tpu.dot_dimension_numbers<[2], [1], [1], [2], [0, 0, 0, 1, 1, 2], [0], [0]>} : vector<2x16x16xbf16>, vector<2x16x32xbf16>, vector<2x16x32xf32> -> vector<2x16x32xf32>
    "tpu.trace_stop"() : () -> ()
    %21 = arith.addf %20, %9 : vector<2x16x32xf32>
    %22 = arith.truncf %18 : vector<2x16x16xf32> to vector<2x16x16xbf16>
    "tpu.trace_start"() <{level = 10 : i32, message = "bij,bjf->bif"}> : () -> ()
    %cst_16 = arith.constant dense<0.000000e+00> : vector<2x16x16xf32>
    %23 = tpu.matmul %0, %22, %cst_16 {dimension_numbers = #tpu.dot_dimension_numbers<[2], [1], [1], [2], [0, 0, 0, 1, 1, 2], [0], [0]>} : vector<2x16x16xbf16>, vector<2x16x16xbf16>, vector<2x16x16xf32> -> vector<2x16x16xf32>
    "tpu.trace_stop"() : () -> ()
    %24 = arith.addf %23, %18 : vector<2x16x16xf32>
    %25 = vector.shape_cast %21 : vector<2x16x32xf32> to vector<32x32xf32>
    %26 = arith.truncf %25 : vector<32x32xf32> to vector<32x32xbf16>
    %c0_17 = arith.constant 0 : index
    %c0_18 = arith.constant 0 : index
    %27 = vector.load %arg8[%c0_17, %c0_18] : memref<32x16xbf16, #tpu.memory_space<vmem>>, vector<32x16xbf16>
    %cst_19 = arith.constant dense<0.000000e+00> : vector<32x16xf32>
    %28 = tpu.matmul %26, %27, %cst_19 {dimension_numbers = #tpu.dot_dimension_numbers<[1], [0], [0], [1], [0, 0, 1, 1], [], []>} : vector<32x32xbf16>, vector<32x16xbf16>, vector<32x16xf32> -> vector<32x16xf32>
    %c0_20 = arith.constant 0 : index
    %c0_21 = arith.constant 0 : index
    %29 = vector.load %arg9[%c0_20, %c0_21] : memref<1x16xf32, #tpu.memory_space<vmem>>, vector<1x16xf32>
    %30 = vector.broadcast %29 : vector<1x16xf32> to vector<32x16xf32>
    %31 = arith.addf %28, %30 : vector<32x16xf32>
    %cst_22 = arith.constant 0.000000e+00 : f32
    %32 = vector.broadcast %cst_22 : f32 to vector<32x16xf32>
    %33 = arith.maximumf %31, %32 : vector<32x16xf32>
    %34 = vector.shape_cast %33 : vector<32x16xf32> to vector<2x16x16xf32>
    %c0_23 = arith.constant 0 : index
    %c0_24 = arith.constant 0 : index
    %c0_25 = arith.constant 0 : index
    %35 = vector.load %arg12[%c0_23, %c0_24, %c0_25] : memref<2x16x16xf32, #tpu.memory_space<vmem>>, vector<2x16x16xf32>
    tpu.vector_store %arg12[%c0_23, %c0_24, %c0_25], %34 {strides = array<i32>} : memref<2x16x16xf32, #tpu.memory_space<vmem>>, vector<2x16x16xf32>,
    %36 = vector.shape_cast %24 : vector<2x16x16xf32> to vector<32x16xf32>
    %37 = arith.truncf %36 : vector<32x16xf32> to vector<32x16xbf16>
    %c0_26 = arith.constant 0 : index
    %c0_27 = arith.constant 0 : index
    %38 = vector.load %arg10[%c0_26, %c0_27] : memref<16x8xbf16, #tpu.memory_space<vmem>>, vector<16x8xbf16>
    %cst_28 = arith.constant dense<0.000000e+00> : vector<32x8xf32>
    %39 = tpu.matmul %37, %38, %cst_28 {dimension_numbers = #tpu.dot_dimension_numbers<[1], [0], [0], [1], [0, 0, 1, 1], [], []>} : vector<32x16xbf16>, vector<16x8xbf16>, vector<32x8xf32> -> vector<32x8xf32>
    %c0_29 = arith.constant 0 : index
    %c0_30 = arith.constant 0 : index
    %40 = vector.load %arg11[%c0_29, %c0_30] : memref<1x8xf32, #tpu.memory_space<vmem>>, vector<1x8xf32>
    %41 = vector.broadcast %40 : vector<1x8xf32> to vector<32x8xf32>
    %42 = arith.addf %39, %41 : vector<32x8xf32>
    %cst_31 = arith.constant 0.000000e+00 : f32
    %43 = vector.broadcast %cst_31 : f32 to vector<32x8xf32>
    %44 = arith.maximumf %42, %43 : vector<32x8xf32>
    %45 = vector.shape_cast %44 : vector<32x8xf32> to vector<2x16x8xf32>
    %c0_32 = arith.constant 0 : index
    %c0_33 = arith.constant 0 : index
    %c0_34 = arith.constant 0 : index
    %46 = vector.load %arg13[%c0_32, %c0_33, %c0_34] : memref<2x16x8xf32, #tpu.memory_space<vmem>>, vector<2x16x8xf32>
    tpu.vector_store %arg13[%c0_32, %c0_33, %c0_34], %45 {strides = array<i32>} : memref<2x16x8xf32, #tpu.memory_space<vmem>>, vector<2x16x8xf32>,
    return
  }
  func.func @transform_0(%arg0: i32) -> (i32, i32, i32) {
    %c0_i32 = arith.constant 0 : i32
    %c0_i32_0 = arith.constant 0 : i32
    %c0_i32_1 = arith.constant 0 : i32
    return %arg0, %c0_i32, %c0_i32_0 : i32, i32, i32
  }
  func.func @transform_1(%arg0: i32) -> (i32, i32, i32) {
    %c0_i32 = arith.constant 0 : i32
    %c0_i32_0 = arith.constant 0 : i32
    %c0_i32_1 = arith.constant 0 : i32
    return %arg0, %c0_i32, %c0_i32_0 : i32, i32, i32
  }
  func.func @transform_2(%arg0: i32) -> (i32, i32, i32) {
    %c0_i32 = arith.constant 0 : i32
    %c0_i32_0 = arith.constant 0 : i32
    %c0_i32_1 = arith.constant 0 : i32
    return %arg0, %c0_i32, %c0_i32_0 : i32, i32, i32
  }
  func.func @transform_3(%arg0: i32) -> (i32, i32) {
    %c0_i32 = arith.constant 0 : i32
    %c0_i32_0 = arith.constant 0 : i32
    %c0_i32_1 = arith.constant 0 : i32
    return %c0_i32, %c0_i32_0 : i32, i32
  }
  func.func @transform_4(%arg0: i32) -> (i32, i32) {
    %c0_i32 = arith.constant 0 : i32
    %c0_i32_0 = arith.constant 0 : i32
    %c0_i32_1 = arith.constant 0 : i32
    return %c0_i32, %c0_i32_0 : i32, i32
  }
  func.func @transform_5(%arg0: i32) -> (i32, i32) {
    %c0_i32 = arith.constant 0 : i32
    %c0_i32_0 = arith.constant 0 : i32
    %c0_i32_1 = arith.constant 0 : i32
    return %c0_i32, %c0_i32_0 : i32, i32
  }
  func.func @transform_6(%arg0: i32) -> (i32, i32) {
    %c0_i32 = arith.constant 0 : i32
    %c0_i32_0 = arith.constant 0 : i32
    %c0_i32_1 = arith.constant 0 : i32
    return %c0_i32, %c0_i32_0 : i32, i32
  }
  func.func @transform_7(%arg0: i32) -> (i32, i32) {
    %c0_i32 = arith.constant 0 : i32
    %c0_i32_0 = arith.constant 0 : i32
    %c0_i32_1 = arith.constant 0 : i32
    return %c0_i32, %c0_i32_0 : i32, i32
  }
  func.func @transform_8(%arg0: i32) -> (i32, i32) {
    %c0_i32 = arith.constant 0 : i32
    %c0_i32_0 = arith.constant 0 : i32
    %c0_i32_1 = arith.constant 0 : i32
    return %c0_i32, %c0_i32_0 : i32, i32
  }
  func.func @transform_9(%arg0: i32) -> (i32, i32) {
    %c0_i32 = arith.constant 0 : i32
    %c0_i32_0 = arith.constant 0 : i32
    %c0_i32_1 = arith.constant 0 : i32
    return %c0_i32, %c0_i32_0 : i32, i32
  }
  func.func @transform_10(%arg0: i32) -> (i32, i32) {
    %c0_i32 = arith.constant 0 : i32
    %c0_i32_0 = arith.constant 0 : i32
    %c0_i32_1 = arith.constant 0 : i32
    return %c0_i32, %c0_i32_0 : i32, i32
  }
  func.func @transform_11(%arg0: i32) -> (i32, i32, i32) {
    %c0_i32 = arith.constant 0 : i32
    %c0_i32_0 = arith.constant 0 : i32
    %c0_i32_1 = arith.constant 0 : i32
    return %arg0, %c0_i32, %c0_i32_0 : i32, i32, i32
  }
  func.func @transform_12(%arg0: i32) -> (i32, i32, i32) {
    %c0_i32 = arith.constant 0 : i32
    %c0_i32_0 = arith.constant 0 : i32
    %c0_i32_1 = arith.constant 0 : i32
    return %arg0, %c0_i32, %c0_i32_0 : i32, i32, i32
  }
}

module attributes {stable_mosaic.version = 11 : i64} {
  func.func @_bn_softmax_pool_kernel(%arg0: i32, %arg1: memref<2x16x16xf32, #tpu.memory_space<vmem>>, %arg2: memref<2x16x8xf32, #tpu.memory_space<vmem>>, %arg3: memref<1x16xf32, #tpu.memory_space<vmem>>, %arg4: memref<1x16xf32, #tpu.memory_space<vmem>>, %arg5: memref<1x8xf32, #tpu.memory_space<vmem>>, %arg6: memref<1x8xf32, #tpu.memory_space<vmem>>, %arg7: memref<2x16x8xf32, #tpu.memory_space<vmem>>, %arg8: memref<2x8x16xf32, #tpu.memory_space<vmem>>) attributes {dimension_semantics = [#tpu.dimension_semantics<parallel>], iteration_bounds = array<i64: 1>, scalar_prefetch = 0 : i64, scratch_operands = 0 : i64, tpu.core_type = #tpu.core_type<tc>, window_params = [{transform_indices = @transform_0, window_bounds = array<i64: 2, 16, 16>}, {transform_indices = @transform_1, window_bounds = array<i64: 2, 16, 8>}, {pipeline_mode = #tpu.pipeline_mode<synchronous>, transform_indices = @transform_2, window_bounds = array<i64: 1, 16>}, {pipeline_mode = #tpu.pipeline_mode<synchronous>, transform_indices = @transform_3, window_bounds = array<i64: 1, 16>}, {pipeline_mode = #tpu.pipeline_mode<synchronous>, transform_indices = @transform_4, window_bounds = array<i64: 1, 8>}, {pipeline_mode = #tpu.pipeline_mode<synchronous>, transform_indices = @transform_5, window_bounds = array<i64: 1, 8>}, {transform_indices = @transform_6, window_bounds = array<i64: 2, 16, 8>}, {transform_indices = @transform_7, window_bounds = array<i64: 2, 8, 16>}]} {
    %c0 = arith.constant 0 : index
    %c0_0 = arith.constant 0 : index
    %c0_1 = arith.constant 0 : index
    %0 = vector.load %arg1[%c0, %c0_0, %c0_1] : memref<2x16x16xf32, #tpu.memory_space<vmem>>, vector<2x16x16xf32>
    %c0_2 = arith.constant 0 : index
    %c0_3 = arith.constant 0 : index
    %1 = vector.load %arg3[%c0_2, %c0_3] : memref<1x16xf32, #tpu.memory_space<vmem>>, vector<1x16xf32>
    %2 = vector.shape_cast %1 : vector<1x16xf32> to vector<1x1x16xf32>
    %3 = vector.broadcast %2 : vector<1x1x16xf32> to vector<2x16x16xf32>
    %4 = arith.mulf %0, %3 : vector<2x16x16xf32>
    %c0_4 = arith.constant 0 : index
    %c0_5 = arith.constant 0 : index
    %5 = vector.load %arg4[%c0_4, %c0_5] : memref<1x16xf32, #tpu.memory_space<vmem>>, vector<1x16xf32>
    %6 = vector.shape_cast %5 : vector<1x16xf32> to vector<1x1x16xf32>
    %7 = vector.broadcast %6 : vector<1x1x16xf32> to vector<2x16x16xf32>
    %8 = arith.addf %4, %7 : vector<2x16x16xf32>
    %c0_6 = arith.constant 0 : index
    %c0_7 = arith.constant 0 : index
    %c0_8 = arith.constant 0 : index
    %9 = vector.load %arg2[%c0_6, %c0_7, %c0_8] : memref<2x16x8xf32, #tpu.memory_space<vmem>>, vector<2x16x8xf32>
    %c0_9 = arith.constant 0 : index
    %c0_10 = arith.constant 0 : index
    %10 = vector.load %arg5[%c0_9, %c0_10] : memref<1x8xf32, #tpu.memory_space<vmem>>, vector<1x8xf32>
    %11 = vector.shape_cast %10 : vector<1x8xf32> to vector<1x1x8xf32>
    %12 = vector.broadcast %11 : vector<1x1x8xf32> to vector<2x16x8xf32>
    %13 = arith.mulf %9, %12 : vector<2x16x8xf32>
    %c0_11 = arith.constant 0 : index
    %c0_12 = arith.constant 0 : index
    %14 = vector.load %arg6[%c0_11, %c0_12] : memref<1x8xf32, #tpu.memory_space<vmem>>, vector<1x8xf32>
    %15 = vector.shape_cast %14 : vector<1x8xf32> to vector<1x1x8xf32>
    %16 = vector.broadcast %15 : vector<1x1x8xf32> to vector<2x16x8xf32>
    %17 = arith.addf %13, %16 : vector<2x16x8xf32>
    %cst = arith.constant dense<0xFF800000> : vector<2x16xf32>
    %18 = vector.multi_reduction <maximumf>, %17, %cst [2] : vector<2x16x8xf32> to vector<2x16xf32>
    %19 = vector.shape_cast %18 : vector<2x16xf32> to vector<2x16x1xf32>
    %20 = vector.broadcast %19 : vector<2x16x1xf32> to vector<2x16x8xf32>
    %21 = arith.subf %17, %20 : vector<2x16x8xf32>
    %22 = math.exp %21 : vector<2x16x8xf32>
    %cst_13 = arith.constant dense<0.000000e+00> : vector<2x16xf32>
    %23 = vector.multi_reduction <add>, %22, %cst_13 [2] : vector<2x16x8xf32> to vector<2x16xf32>
    %24 = vector.shape_cast %23 : vector<2x16xf32> to vector<2x16x1xf32>
    %25 = tpu.reciprocal %24 {approx = true} : vector<2x16x1xf32> -> vector<2x16x1xf32>
    %26 = vector.broadcast %25 : vector<2x16x1xf32> to vector<2x16x8xf32>
    %27 = arith.mulf %22, %26 : vector<2x16x8xf32>
    %c0_14 = arith.constant 0 : index
    %c0_15 = arith.constant 0 : index
    %c0_16 = arith.constant 0 : index
    %28 = vector.load %arg7[%c0_14, %c0_15, %c0_16] : memref<2x16x8xf32, #tpu.memory_space<vmem>>, vector<2x16x8xf32>
    tpu.vector_store %arg7[%c0_14, %c0_15, %c0_16], %27 {strides = array<i32>} : memref<2x16x8xf32, #tpu.memory_space<vmem>>, vector<2x16x8xf32>,
    %29 = arith.truncf %27 : vector<2x16x8xf32> to vector<2x16x8xbf16>
    %30 = arith.truncf %8 : vector<2x16x16xf32> to vector<2x16x16xbf16>
    "tpu.trace_start"() <{level = 10 : i32, message = "bnk,bnd->bkd"}> : () -> ()
    %cst_17 = arith.constant dense<0.000000e+00> : vector<2x8x16xf32>
    %31 = tpu.matmul %29, %30, %cst_17 {dimension_numbers = #tpu.dot_dimension_numbers<[1], [1], [2], [2], [0, 0, 0, 2, 1, 2], [0], [0]>} : vector<2x16x8xbf16>, vector<2x16x16xbf16>, vector<2x8x16xf32> -> vector<2x8x16xf32>
    "tpu.trace_stop"() : () -> ()
    %c0_18 = arith.constant 0 : index
    %c0_19 = arith.constant 0 : index
    %c0_20 = arith.constant 0 : index
    %32 = vector.load %arg8[%c0_18, %c0_19, %c0_20] : memref<2x8x16xf32, #tpu.memory_space<vmem>>, vector<2x8x16xf32>
    tpu.vector_store %arg8[%c0_18, %c0_19, %c0_20], %31 {strides = array<i32>} : memref<2x8x16xf32, #tpu.memory_space<vmem>>, vector<2x8x16xf32>,
    return
  }
  func.func @transform_0(%arg0: i32) -> (i32, i32, i32) {
    %c0_i32 = arith.constant 0 : i32
    %c0_i32_0 = arith.constant 0 : i32
    %c0_i32_1 = arith.constant 0 : i32
    return %arg0, %c0_i32, %c0_i32_0 : i32, i32, i32
  }
  func.func @transform_1(%arg0: i32) -> (i32, i32, i32) {
    %c0_i32 = arith.constant 0 : i32
    %c0_i32_0 = arith.constant 0 : i32
    %c0_i32_1 = arith.constant 0 : i32
    return %arg0, %c0_i32, %c0_i32_0 : i32, i32, i32
  }
  func.func @transform_2(%arg0: i32) -> (i32, i32) {
    %c0_i32 = arith.constant 0 : i32
    %c0_i32_0 = arith.constant 0 : i32
    %c0_i32_1 = arith.constant 0 : i32
    return %c0_i32, %c0_i32_0 : i32, i32
  }
  func.func @transform_3(%arg0: i32) -> (i32, i32) {
    %c0_i32 = arith.constant 0 : i32
    %c0_i32_0 = arith.constant 0 : i32
    %c0_i32_1 = arith.constant 0 : i32
    return %c0_i32, %c0_i32_0 : i32, i32
  }
  func.func @transform_4(%arg0: i32) -> (i32, i32) {
    %c0_i32 = arith.constant 0 : i32
    %c0_i32_0 = arith.constant 0 : i32
    %c0_i32_1 = arith.constant 0 : i32
    return %c0_i32, %c0_i32_0 : i32, i32
  }
  func.func @transform_5(%arg0: i32) -> (i32, i32) {
    %c0_i32 = arith.constant 0 : i32
    %c0_i32_0 = arith.constant 0 : i32
    %c0_i32_1 = arith.constant 0 : i32
    return %c0_i32, %c0_i32_0 : i32, i32
  }
  func.func @transform_6(%arg0: i32) -> (i32, i32, i32) {
    %c0_i32 = arith.constant 0 : i32
    %c0_i32_0 = arith.constant 0 : i32
    %c0_i32_1 = arith.constant 0 : i32
    return %arg0, %c0_i32, %c0_i32_0 : i32, i32, i32
  }
  func.func @transform_7(%arg0: i32) -> (i32, i32, i32) {
    %c0_i32 = arith.constant 0 : i32
    %c0_i32_0 = arith.constant 0 : i32
    %c0_i32_1 = arith.constant 0 : i32
    return %arg0, %c0_i32, %c0_i32_0 : i32, i32, i32
  }
}

</mosaic_0001>

<llo_original>
// kernel: soft_clustering_forward.5
$region0: #{soft_clustering_forward.5}
  #allocation0 [shape = 'u32[]', space=smem, size = 0x4, offset = 0x4, fixed_abs, tag = 'smem constant byte address 0x4 - core index']
  #allocation1 [shape = 'u32[144,128]{1,0:T(1,128)}', space=vmem, size = 0x12000, scoped, tag = 'internal scratch']
  %s0 = inlined_call_operand.vmem [shape: f32[2,16,16], index: 0, kind: input, shape index: {}]
  %s1 = inlined_call_operand.vmem [shape: f32[2,16,8], index: 1, kind: input, shape index: {}]
  %s2 = inlined_call_operand.vmem [shape: f32[1,16], index: 2, kind: input, shape index: {}]
  %s3 = inlined_call_operand.vmem [shape: f32[1,16], index: 3, kind: input, shape index: {}]
  %s4 = inlined_call_operand.vmem [shape: f32[1,8], index: 4, kind: input, shape index: {}]
  %s5 = inlined_call_operand.vmem [shape: f32[1,8], index: 5, kind: input, shape index: {}]
  %s6 = inlined_call_operand.vmem [shape: f32[2,16,8], index: 6, kind: output, shape index: {0}]
  %s7 = inlined_call_operand.hbm [shape: f32[2,8,16], index: 7, kind: output, shape index: {1}]
  %8 = xla_tuple %s6, %s7
  %s9 = sld [smem:[#allocation0]]
  $region42: #{soft_clustering_forward.5} parent=0
    _
  %s11 = ssub.s32 1, %s9
  %s12 = scalar_select 0, %s11, %s9
  $region1: #{soft_clustering_forward.5} parent=0
    #allocation2 [shape = 'u8[8192]{0}', space=vmem, size = 0x2000, scoped, tag = 'output window, operand 1, single buffered']
    #allocation3 [shape = 's32[1]{0}', space=sflag, size = 0x4, scoped, tag = 'scoped memory for soft_clustering_forward.5']
    %13 = vsyncpa [#allocation3], 0
    // Predicated region
    $region2: #{soft_clustering_forward.5} parent=1 // pred_check
      _
    $region3: #{soft_clustering_forward.5} parent=1 // pred_check_branch
      %15 = sbr.rel (0) target = $region5
    $region4: #{soft_clustering_forward.5} parent=1 // pred_region
      _
    $region5: #{soft_clustering_forward.5} parent=1 // pred_fallthru
      _
    // Predicated region
    $region6: #{soft_clustering_forward.5} parent=1 // pred_check
      _
    $region7: #{soft_clustering_forward.5} parent=1 // pred_check_branch
      %17 = sbr.rel (0) target = $region9
    $region8: #{soft_clustering_forward.5} parent=1 // pred_region
      _
    $region9: #{soft_clustering_forward.5} parent=1 // pred_fallthru
      _
    // Predicated region
    $region10: #{soft_clustering_forward.5} parent=1 // pred_check
      _
    $region11: #{soft_clustering_forward.5} parent=1 // pred_check_branch
      %19 = sbr.rel (0) target = $region13
    $region12: #{soft_clustering_forward.5} parent=1 // pred_region
      _
    $region13: #{soft_clustering_forward.5} parent=1 // pred_fallthru
      _
    // Predicated region
    $region14: #{soft_clustering_forward.5} parent=1 // pred_check
      _
    $region15: #{soft_clustering_forward.5} parent=1 // pred_check_branch
      %21 = sbr.rel (0) target = $region17
    $region16: #{soft_clustering_forward.5} parent=1 // pred_region
      _
    $region17: #{soft_clustering_forward.5} parent=1 // pred_fallthru
      _
    // Predicated region
    $region18: #{soft_clustering_forward.5} parent=1 // pred_check
      _
    $region19: #{soft_clustering_forward.5} parent=1 // pred_check_branch
      %23 = sbr.rel (0) target = $region21
    $region20: #{soft_clustering_forward.5} parent=1 // pred_region
      _
    $region21: #{soft_clustering_forward.5} parent=1 // pred_fallthru
      _
    // Predicated region
    $region22: #{soft_clustering_forward.5} parent=1 // pred_check
      _
    $region23: #{soft_clustering_forward.5} parent=1 // pred_check_branch
      %25 = sbr.rel (0) target = $region25
    $region24: #{soft_clustering_forward.5} parent=1 // pred_region
      _
    $region25: #{soft_clustering_forward.5} parent=1 // pred_fallthru
      _
    %v27 = vld [vmem:[%s0] sm:$0xff]
    %v28 = vld [vmem:[%s0 + $0x8] sm:$0xff]
    %v29 = vld [vmem:[%s0 + $0x10] sm:$0xff]
    %v30 = vld [vmem:[%s0 + $0x18] sm:$0xff]
    %v31 = vld [vmem:[%s2] sm:$0x1]
    %v33 = vlaneseq
    %v34 = vshrl.u32 %v33, 7
    %v35 = vsub.s32 0, %v34
    %v36 = vrot.slane %v31, %v35
    %v38 = vmul.f32 %v27, %v36
    %v39 = vmul.f32 %v28, %v36
    %v40 = vmul.f32 %v29, %v36
    %v41 = vmul.f32 %v30, %v36
    %v42 = vld [vmem:[%s3] sm:$0x1]
    %v44 = vlaneseq
    %v45 = vshrl.u32 %v44, 7
    %v46 = vsub.s32 0, %v45
    %v47 = vrot.slane %v42, %v46
    %v49 = vadd.f32 %v38, %v47
    %v50 = vadd.f32 %v39, %v47
    %v51 = vadd.f32 %v40, %v47
    %v52 = vadd.f32 %v41, %v47
    %v53 = vld [vmem:[%s1] sm:$0xff]
    %v54 = vld [vmem:[%s1 + $0x8] sm:$0xff]
    %v55 = vld [vmem:[%s1 + $0x10] sm:$0xff]
    %v56 = vld [vmem:[%s1 + $0x18] sm:$0xff]
    %v57 = vld [vmem:[%s4] sm:$0x1]
    %v59 = vlaneseq
    %v60 = vshrl.u32 %v59, 7
    %v61 = vsub.s32 0, %v60
    %v62 = vrot.slane %v57, %v61
    %v64 = vmul.f32 %v53, %v62
    %v65 = vmul.f32 %v54, %v62
    %v66 = vmul.f32 %v55, %v62
    %v67 = vmul.f32 %v56, %v62
    %v68 = vld [vmem:[%s5] sm:$0x1]
    %v70 = vlaneseq
    %v71 = vshrl.u32 %v70, 7
    %v72 = vsub.s32 0, %v71
    %v73 = vrot.slane %v68, %v72
    %v75 = vadd.f32 %v64, %v73
    %v76 = vadd.f32 %v65, %v73
    %v77 = vadd.f32 %v66, %v73
    %v78 = vadd.f32 %v67, %v73
    %vm79 = vcmask 64512
    %v80 = vsel %vm79, %v75, -inf
    %81 = vmax.xlane.f32.xlu0 %v80
    %v82 = vpop.xlane.xlu0 %81
    %v83 = vsel %vm79, %v76, -inf
    %84 = vmax.xlane.f32.xlu0 %v83
    %v85 = vpop.xlane.xlu0 %84
    %v86 = vsel %vm79, %v77, -inf
    %87 = vmax.xlane.f32.xlu0 %v86
    %v88 = vpop.xlane.xlu0 %87
    %v89 = vsel %vm79, %v78, -inf
    %90 = vmax.xlane.f32.xlu0 %v89
    %v91 = vpop.xlane.xlu0 %90
    %v92 = vsub.f32 %v75, %v82
    %v93 = vsub.f32 %v76, %v85
    %v94 = vsub.f32 %v77, %v88
    %v95 = vsub.f32 %v78, %v91
    %v96 = vmul.f32 %v92, 1.442695
    %v97 = vpow.pop %v96
    %v98 = vmul.f32 %v93, 1.442695
    %v99 = vpow.pop %v98
    %v100 = vmul.f32 %v94, 1.442695
    %v101 = vpow.pop %v100
    %v102 = vmul.f32 %v95, 1.442695
    %v103 = vpow.pop %v102
    %v104 = vsel %vm79, %v97, 0.0
    %105 = vadd.xlane.f32.xlu0 %v104
    %v106 = vpop.xlane.xlu0 %105
    %v107 = vsel %vm79, %v99, 0.0
    %108 = vadd.xlane.f32.xlu0 %v107
    %v109 = vpop.xlane.xlu0 %108
    %v110 = vsel %vm79, %v101, 0.0
    %111 = vadd.xlane.f32.xlu0 %v110
    %v112 = vpop.xlane.xlu0 %111
    %v113 = vsel %vm79, %v103, 0.0
    %114 = vadd.xlane.f32.xlu0 %v113
    %v115 = vpop.xlane.xlu0 %114
    %v116 = vrcp.pop %v106
    %v117 = vrcp.pop %v109
    %v118 = vrcp.pop %v112
    %v119 = vrcp.pop %v115
    %v120 = vmul.f32 %v97, %v116
    %v121 = vmul.f32 %v99, %v117
    %v122 = vmul.f32 %v101, %v118
    %v123 = vmul.f32 %v103, %v119
    %124 = vst.msk [vmem:[%s6] sm:$0xff] %vm79, %v120
    %125 = vst.msk [vmem:[%s6 + $0x8] sm:$0xff] %vm79, %v121
    %126 = vst.msk [vmem:[%s6 + $0x10] sm:$0xff] %vm79, %v122
    %127 = vst.msk [vmem:[%s6 + $0x18] sm:$0xff] %vm79, %v123
    %v128 = vpack.c.bf16 %v121, %v120
    %v129 = vpack.c.bf16 %v123, %v122
    %v130 = vpack.c.bf16 %v50, %v49
    %v131 = vpack.c.bf16 %v52, %v51
    %132 = vxpose.xlu0.c.b16.start [1/8] %v128, 128
    %133 = vxpose.xlu0.c.b16.cont [2/8] 0, 128
    %134 = vxpose.xlu0.c.b16.cont [3/8] 0, 128
    %135 = vxpose.xlu0.c.b16.cont [4/8] 0, 128
    %136 = vxpose.xlu0.c.b16.cont [5/8] 0, 128
    %137 = vxpose.xlu0.c.b16.cont [6/8] 0, 128
    %138 = vxpose.xlu0.c.b16.cont [7/8] 0, 128
    %139 = vxpose.xlu0.c.b16.end [8/8] 0, 128
    %v140 = vpop.trf.xlu0
    %v141 = vpop.trf.xlu0
    %v142 = vpop.trf.xlu0
    %v143 = vpop.trf.xlu0
    %v144 = vpop.trf.xlu0
    %v145 = vpop.trf.xlu0
    %v146 = vpop.trf.xlu0
    %v147 = vpop.trf.xlu0
    %vm148 = vcmask 130048
    %v150 = vsel %vm148, %v140, 0
    %152 = vmatprep.subr.bf16.mxu0 0
    %153 = vmatpush1.bf16.msra.mxu0 0
    %154 = vmatprep.subr.bf16.mxu0 0
    %155 = vmatpush1.bf16.msra.mxu0 0
    %156 = vmatprep.subr.bf16.mxu0 0
    %157 = vmatpush1.bf16.msra.mxu0 0
    %158 = vmatprep.subr.bf16.mxu0 0
    %159 = vmatpush1.bf16.msra.mxu0 0
    %160 = vmatprep.subr.bf16.mxu0 0
    %161 = vmatpush1.bf16.msra.mxu0 0
    %162 = vmatprep.subr.bf16.mxu0 0
    %163 = vmatpush1.bf16.msra.mxu0 0
    %164 = vmatprep.subr.bf16.mxu0 0
    %165 = vmatpush1.bf16.msra.mxu0 0
    %166 = vmatprep.subr.bf16.mxu0 0
    %167 = vmatpush1.bf16.msra.mxu0 %v130
    %168 = vmatprep.subr.bf16.mxu0 0
    %169 = vmatpush2.bf16.msra.mxu0 0
    %170 = vmatprep.subr.bf16.mxu0 0
    %171 = vmatpush2.bf16.msra.mxu0 0
    %172 = vmatprep.subr.bf16.mxu0 0
    %173 = vmatpush2.bf16.msra.mxu0 0
    %174 = vmatprep.subr.bf16.mxu0 0
    %175 = vmatpush2.bf16.msra.mxu0 0
    %176 = vmatprep.subr.bf16.mxu0 0
    %177 = vmatpush2.bf16.msra.mxu0 0
    %178 = vmatprep.subr.bf16.mxu0 0
    %179 = vmatpush2.bf16.msra.mxu0 0
    %180 = vmatprep.subr.bf16.mxu0 0
    %181 = vmatpush2.bf16.msra.mxu0 0
    %182 = vmatprep.subr.bf16.mxu0 0
    %183 = vmatpush2.bf16.msra.mxu0 0
    %184 = vmatprep.mubr.bf16.mxu0 0
    %185 = vmatmul.mubr.bf16.gmra.mxu0 %v150
    %v186 = vpop.f32.mrf.mxu0
    %v187 = vadd.f32 0.0, %v186
    %v188 = vpop.f32.mrf.mxu0
    %v189 = vpop.f32.mrf.mxu0
    %v190 = vpop.f32.mrf.mxu0
    %191 = vdwg.mxu0
    %192 = vxpose.xlu0.c.b16.start [1/8] %v129, 128
    %193 = vxpose.xlu0.c.b16.cont [2/8] 0, 128
    %194 = vxpose.xlu0.c.b16.cont [3/8] 0, 128
    %195 = vxpose.xlu0.c.b16.cont [4/8] 0, 128
    %196 = vxpose.xlu0.c.b16.cont [5/8] 0, 128
    %197 = vxpose.xlu0.c.b16.cont [6/8] 0, 128
    %198 = vxpose.xlu0.c.b16.cont [7/8] 0, 128
    %199 = vxpose.xlu0.c.b16.end [8/8] 0, 128
    %v200 = vpop.trf.xlu0
    %v201 = vpop.trf.xlu0
    %v202 = vpop.trf.xlu0
    %v203 = vpop.trf.xlu0
    %v204 = vpop.trf.xlu0
    %v205 = vpop.trf.xlu0
    %v206 = vpop.trf.xlu0
    %v207 = vpop.trf.xlu0
    %v209 = vsel %vm148, %v200, 0
    %211 = vmatprep.subr.bf16.mxu0 0
    %212 = vmatpush1.bf16.msra.mxu0 0
    %213 = vmatprep.subr.bf16.mxu0 0
    %214 = vmatpush1.bf16.msra.mxu0 0
    %215 = vmatprep.subr.bf16.mxu0 0
    %216 = vmatpush1.bf16.msra.mxu0 0
    %217 = vmatprep.subr.bf16.mxu0 0
    %218 = vmatpush1.bf16.msra.mxu0 0
    %219 = vmatprep.subr.bf16.mxu0 0
    %220 = vmatpush1.bf16.msra.mxu0 0
    %221 = vmatprep.subr.bf16.mxu0 0
    %222 = vmatpush1.bf16.msra.mxu0 0
    %223 = vmatprep.subr.bf16.mxu0 0
    %224 = vmatpush1.bf16.msra.mxu0 0
    %225 = vmatprep.subr.bf16.mxu0 0
    %226 = vmatpush1.bf16.msra.mxu0 %v131
    %227 = vmatprep.subr.bf16.mxu0 0
    %228 = vmatpush2.bf16.msra.mxu0 0
    %229 = vmatprep.subr.bf16.mxu0 0
    %230 = vmatpush2.bf16.msra.mxu0 0
    %231 = vmatprep.subr.bf16.mxu0 0
    %232 = vmatpush2.bf16.msra.mxu0 0
    %233 = vmatprep.subr.bf16.mxu0 0
    %234 = vmatpush2.bf16.msra.mxu0 0
    %235 = vmatprep.subr.bf16.mxu0 0
    %236 = vmatpush2.bf16.msra.mxu0 0
    %237 = vmatprep.subr.bf16.mxu0 0
    %238 = vmatpush2.bf16.msra.mxu0 0
    %239 = vmatprep.subr.bf16.mxu0 0
    %240 = vmatpush2.bf16.msra.mxu0 0
    %241 = vmatprep.subr.bf16.mxu0 0
    %242 = vmatpush2.bf16.msra.mxu0 0
    %243 = vmatprep.mubr.bf16.mxu0 0
    %244 = vmatmul.mubr.bf16.gmra.mxu0 %v209
    %v245 = vpop.f32.mrf.mxu0
    %v246 = vadd.f32 0.0, %v245
    %v247 = vpop.f32.mrf.mxu0
    %v248 = vpop.f32.mrf.mxu0
    %v249 = vpop.f32.mrf.mxu0
    %250 = vdwg.mxu0
    %251 = vst.msk [vmem:[#allocation2] sm:$0xff] %vm148, %v187
    %252 = vst.msk [vmem:[#allocation2 + $0x8] sm:$0xff] %vm148, %v246
    // Predicated region
    $region26: #{soft_clustering_forward.5} parent=1 // pred_check
      _
    $region27: #{soft_clustering_forward.5} parent=1 // pred_check_branch
      %254 = sbr.rel (0) target = $region29
    $region28: #{soft_clustering_forward.5} parent=1 // pred_region
      _
    $region29: #{soft_clustering_forward.5} parent=1 // pred_fallthru
      _
    // Predicated region
    $region30: #{soft_clustering_forward.5} parent=1 // pred_check
      _
    $region31: #{soft_clustering_forward.5} parent=1 // pred_check_branch
      %256 = sbr.rel (0) target = $region33
    $region32: #{soft_clustering_forward.5} parent=1 // pred_region
      %s258 = ssub.s32 256, 256
      %259 = vsyncadd [#allocation3], %s258
      %s260 = sshll.u32 [#allocation2], 4
      %s261 = int_to_ptr.vmem [resolvable:$true] %s260
      %266 = dma.vmem_to_hbm [thread:$0]  %s261, 256, %s7, [#allocation3], 128, 128, 8
    $region33: #{soft_clustering_forward.5} parent=1 // pred_fallthru
      _
    // Predicated region
    $region34: #{soft_clustering_forward.5} parent=1 // pred_check
      _
    $region35: #{soft_clustering_forward.5} parent=1 // pred_check_branch
      %268 = sbr.rel (0) target = $region37
    $region36: #{soft_clustering_forward.5} parent=1 // pred_region
      _
    $region37: #{soft_clustering_forward.5} parent=1 // pred_fallthru
      _
    // Predicated region
    $region38: #{soft_clustering_forward.5} parent=1 // pred_check
      _
    $region39: #{soft_clustering_forward.5} parent=1 // pred_check_branch
      %270 = sbr.rel (0) target = $region41
    $region40: #{soft_clustering_forward.5} parent=1 // pred_region
      %271 = dma.done [#allocation3], 256
    $region41: #{soft_clustering_forward.5} parent=1 // pred_fallthru
      _
    %272 = vsyncpa [#allocation3], 1

// kernel: soft_clustering_forward.3
$region0: #{soft_clustering_forward.3}
  #allocation0 [shape = 'u32[]', space=smem, size = 0x4, offset = 0x4, fixed_abs, tag = 'smem constant byte address 0x4 - core index']
  #allocation1 [shape = 'u32[144,128]{1,0:T(1,128)}', space=vmem, size = 0x12000, scoped, tag = 'internal scratch']
  %s0 = inlined_call_operand.vmem [shape: bf16[2,16,16], index: 0, kind: input, shape index: {}]
  %s1 = inlined_call_operand.vmem [shape: f32[2,16,8], index: 1, kind: input, shape index: {}]
  %s2 = inlined_call_operand.vmem [shape: bf16[8,32], index: 2, kind: input, shape index: {}]
  %s3 = inlined_call_operand.vmem [shape: f32[1,32], index: 3, kind: input, shape index: {}]
  %s4 = inlined_call_operand.vmem [shape: bf16[8,16], index: 4, kind: input, shape index: {}]
  %s5 = inlined_call_operand.vmem [shape: f32[1,16], index: 5, kind: input, shape index: {}]
  %s6 = inlined_call_operand.vmem [shape: f32[2,16,32], index: 6, kind: output, shape index: {0}]
  %s7 = inlined_call_operand.vmem [shape: f32[2,16,16], index: 7, kind: output, shape index: {1}]
  %8 = xla_tuple %s6, %s7
  %s9 = sld [smem:[#allocation0]]
  $region42: #{soft_clustering_forward.3} parent=0
    _
  %s11 = ssub.s32 1, %s9
  %s12 = scalar_select 0, %s11, %s9
  // Predicated region
  $region2: #{soft_clustering_forward.3} parent=0 // pred_check
    _
  $region3: #{soft_clustering_forward.3} parent=0 // pred_check_branch
    %14 = sbr.rel (0) target = $region5
  $region4: #{soft_clustering_forward.3} parent=0 // pred_region
    _
  $region5: #{soft_clustering_forward.3} parent=0 // pred_fallthru
    _
  // Predicated region
  $region6: #{soft_clustering_forward.3} parent=0 // pred_check
    _
  $region7: #{soft_clustering_forward.3} parent=0 // pred_check_branch
    %16 = sbr.rel (0) target = $region9
  $region8: #{soft_clustering_forward.3} parent=0 // pred_region
    _
  $region9: #{soft_clustering_forward.3} parent=0 // pred_fallthru
    _
  // Predicated region
  $region10: #{soft_clustering_forward.3} parent=0 // pred_check
    _
  $region11: #{soft_clustering_forward.3} parent=0 // pred_check_branch
    %18 = sbr.rel (0) target = $region13
  $region12: #{soft_clustering_forward.3} parent=0 // pred_region
    _
  $region13: #{soft_clustering_forward.3} parent=0 // pred_fallthru
    _
  // Predicated region
  $region14: #{soft_clustering_forward.3} parent=0 // pred_check
    _
  $region15: #{soft_clustering_forward.3} parent=0 // pred_check_branch
    %20 = sbr.rel (0) target = $region17
  $region16: #{soft_clustering_forward.3} parent=0 // pred_region
    _
  $region17: #{soft_clustering_forward.3} parent=0 // pred_fallthru
    _
  // Predicated region
  $region18: #{soft_clustering_forward.3} parent=0 // pred_check
    _
  $region19: #{soft_clustering_forward.3} parent=0 // pred_check_branch
    %22 = sbr.rel (0) target = $region21
  $region20: #{soft_clustering_forward.3} parent=0 // pred_region
    _
  $region21: #{soft_clustering_forward.3} parent=0 // pred_fallthru
    _
  // Predicated region
  $region22: #{soft_clustering_forward.3} parent=0 // pred_check
    _
  $region23: #{soft_clustering_forward.3} parent=0 // pred_check_branch
    %24 = sbr.rel (0) target = $region25
  $region24: #{soft_clustering_forward.3} parent=0 // pred_region
    _
  $region25: #{soft_clustering_forward.3} parent=0 // pred_fallthru
    _
  %v26 = vld [vmem:[%s0] sm:$0xf]
  %v27 = vld [vmem:[%s0 + $0x4] sm:$0xf]
  %v28 = vld [vmem:[%s0 + $0x8] sm:$0xf]
  %v29 = vld [vmem:[%s0 + $0xc] sm:$0xf]
  %v30 = vld [vmem:[%s1] sm:$0xff]
  %v31 = vld [vmem:[%s1 + $0x8] sm:$0xff]
  %v32 = vld [vmem:[%s1 + $0x10] sm:$0xff]
  %v33 = vld [vmem:[%s1 + $0x18] sm:$0xff]
  %v34 = vpack.c.bf16 %v31, %v30
  %v35 = vpack.c.bf16 %v33, %v32
  %v38 = vunpack.c.l.b16 %v26
  %v39 = vunpack.c.l.b16 %v27
  %v40 = vpack.c.b16 %v39, %v38
  %vm41 = vcmask 130048
  %v43 = vsel %vm41, %v40, 0
  %45 = vmatprep.subr.bf16.mxu0 0
  %46 = vmatpush1.bf16.msra.mxu0 0
  %47 = vmatprep.subr.bf16.mxu0 0
  %48 = vmatpush1.bf16.msra.mxu0 0
  %49 = vmatprep.subr.bf16.mxu0 0
  %50 = vmatpush1.bf16.msra.mxu0 0
  %51 = vmatprep.subr.bf16.mxu0 0
  %52 = vmatpush1.bf16.msra.mxu0 0
  %53 = vmatprep.subr.bf16.mxu0 0
  %54 = vmatpush1.bf16.msra.mxu0 0
  %55 = vmatprep.subr.bf16.mxu0 0
  %56 = vmatpush1.bf16.msra.mxu0 0
  %57 = vmatprep.subr.bf16.mxu0 0
  %58 = vmatpush1.bf16.msra.mxu0 0
  %59 = vmatprep.subr.bf16.mxu0 0
  %60 = vmatpush1.bf16.msra.mxu0 %v34
  %61 = vmatprep.subr.bf16.mxu0 0
  %62 = vmatpush2.bf16.msra.mxu0 0
  %63 = vmatprep.subr.bf16.mxu0 0
  %64 = vmatpush2.bf16.msra.mxu0 0
  %65 = vmatprep.subr.bf16.mxu0 0
  %66 = vmatpush2.bf16.msra.mxu0 0
  %67 = vmatprep.subr.bf16.mxu0 0
  %68 = vmatpush2.bf16.msra.mxu0 0
  %69 = vmatprep.subr.bf16.mxu0 0
  %70 = vmatpush2.bf16.msra.mxu0 0
  %71 = vmatprep.subr.bf16.mxu0 0
  %72 = vmatpush2.bf16.msra.mxu0 0
  %73 = vmatprep.subr.bf16.mxu0 0
  %74 = vmatpush2.bf16.msra.mxu0 0
  %75 = vmatprep.subr.bf16.mxu0 0
  %76 = vmatpush2.bf16.msra.mxu0 0
  %77 = vmatprep.mubr.bf16.mxu0 0
  %78 = vmatmul.mubr.bf16.gmra.mxu0 %v43
  %v79 = vpop.f32.mrf.mxu0
  %v80 = vadd.f32 %v30, %v79
  %v81 = vpop.f32.mrf.mxu0
  %v82 = vpop.f32.mrf.mxu0
  %v83 = vadd.f32 %v31, %v82
  %v84 = vpop.f32.mrf.mxu0
  %85 = vdwg.mxu0
  %v88 = vunpack.c.l.b16 %v28
  %v89 = vunpack.c.l.b16 %v29
  %v90 = vpack.c.b16 %v89, %v88
  %v92 = vsel %vm41, %v90, 0
  %94 = vmatprep.subr.bf16.mxu0 0
  %95 = vmatpush1.bf16.msra.mxu0 0
  %96 = vmatprep.subr.bf16.mxu0 0
  %97 = vmatpush1.bf16.msra.mxu0 0
  %98 = vmatprep.subr.bf16.mxu0 0
  %99 = vmatpush1.bf16.msra.mxu0 0
  %100 = vmatprep.subr.bf16.mxu0 0
  %101 = vmatpush1.bf16.msra.mxu0 0
  %102 = vmatprep.subr.bf16.mxu0 0
  %103 = vmatpush1.bf16.msra.mxu0 0
  %104 = vmatprep.subr.bf16.mxu0 0
  %105 = vmatpush1.bf16.msra.mxu0 0
  %106 = vmatprep.subr.bf16.mxu0 0
  %107 = vmatpush1.bf16.msra.mxu0 0
  %108 = vmatprep.subr.bf16.mxu0 0
  %109 = vmatpush1.bf16.msra.mxu0 %v35
  %110 = vmatprep.subr.bf16.mxu0 0
  %111 = vmatpush2.bf16.msra.mxu0 0
  %112 = vmatprep.subr.bf16.mxu0 0
  %113 = vmatpush2.bf16.msra.mxu0 0
  %114 = vmatprep.subr.bf16.mxu0 0
  %115 = vmatpush2.bf16.msra.mxu0 0
  %116 = vmatprep.subr.bf16.mxu0 0
  %117 = vmatpush2.bf16.msra.mxu0 0
  %118 = vmatprep.subr.bf16.mxu0 0
  %119 = vmatpush2.bf16.msra.mxu0 0
  %120 = vmatprep.subr.bf16.mxu0 0
  %121 = vmatpush2.bf16.msra.mxu0 0
  %122 = vmatprep.subr.bf16.mxu0 0
  %123 = vmatpush2.bf16.msra.mxu0 0
  %124 = vmatprep.subr.bf16.mxu0 0
  %125 = vmatpush2.bf16.msra.mxu0 0
  %126 = vmatprep.mubr.bf16.mxu0 0
  %127 = vmatmul.mubr.bf16.gmra.mxu0 %v92
  %v128 = vpop.f32.mrf.mxu0
  %v129 = vadd.f32 %v32, %v128
  %v130 = vpop.f32.mrf.mxu0
  %v131 = vpop.f32.mrf.mxu0
  %v132 = vadd.f32 %v33, %v131
  %v133 = vpop.f32.mrf.mxu0
  %134 = vdwg.mxu0
  %v135 = vpack.c.bf16 %v83, %v80
  %v136 = vpack.c.bf16 %v132, %v129
  %v137 = vld [vmem:[%s2] sm:$0xf]
  %v138 = vld [vmem:[%s3] sm:$0x1]
  %v140 = vlaneseq
  %v141 = vshrl.u32 %v140, 7
  %v142 = vsub.s32 0, %v141
  %v143 = vrot.slane %v138, %v142
  %vm145 = vcmask 64512
  %v147 = vsel %vm145, %v135, 0
  %v150 = vsel %vm145, %v136, 0
  %vm152 = vcmask 1043456
  %v154 = vsel %vm152, %v137, 0
  %156 = vmatprep.subr.bf16.mxu0 0
  %157 = vmatpush1.bf16.msra.mxu0 0
  %158 = vmatprep.subr.bf16.mxu0 0
  %159 = vmatpush1.bf16.msra.mxu0 0
  %160 = vmatprep.subr.bf16.mxu0 0
  %161 = vmatpush1.bf16.msra.mxu0 0
  %162 = vmatprep.subr.bf16.mxu0 0
  %163 = vmatpush1.bf16.msra.mxu0 0
  %164 = vmatprep.subr.bf16.mxu0 0
  %165 = vmatpush1.bf16.msra.mxu0 0
  %166 = vmatprep.subr.bf16.mxu0 0
  %167 = vmatpush1.bf16.msra.mxu0 0
  %168 = vmatprep.subr.bf16.mxu0 0
  %169 = vmatpush1.bf16.msra.mxu0 0
  %170 = vmatprep.subr.bf16.mxu0 0
  %171 = vmatpush1.bf16.msra.mxu0 %v154
  %172 = vmatprep.subr.bf16.mxu0 0
  %173 = vmatpush2.bf16.msra.mxu0 0
  %174 = vmatprep.subr.bf16.mxu0 0
  %175 = vmatpush2.bf16.msra.mxu0 0
  %176 = vmatprep.subr.bf16.mxu0 0
  %177 = vmatpush2.bf16.msra.mxu0 0
  %178 = vmatprep.subr.bf16.mxu0 0
  %179 = vmatpush2.bf16.msra.mxu0 0
  %180 = vmatprep.subr.bf16.mxu0 0
  %181 = vmatpush2.bf16.msra.mxu0 0
  %182 = vmatprep.subr.bf16.mxu0 0
  %183 = vmatpush2.bf16.msra.mxu0 0
  %184 = vmatprep.subr.bf16.mxu0 0
  %185 = vmatpush2.bf16.msra.mxu0 0
  %186 = vmatprep.subr.bf16.mxu0 0
  %187 = vmatpush2.bf16.msra.mxu0 0
  %188 = vmatprep.mubr.bf16.mxu0 0
  %189 = vmatmul.mubr.bf16.gmra.mxu0 %v147
  %v190 = vpop.f32.mrf.mxu0
  %v191 = vadd.f32 %v143, %v190
  %v192 = vpop.f32.mrf.mxu0
  %v193 = vpop.f32.mrf.mxu0
  %v194 = vadd.f32 %v143, %v193
  %v195 = vpop.f32.mrf.mxu0
  %196 = vmatprep.mubr.bf16.mxu0 0
  %197 = vmatmul.mubr.bf16.gmra.mxu0 %v150
  %v198 = vpop.f32.mrf.mxu0
  %v199 = vadd.f32 %v143, %v198
  %v200 = vpop.f32.mrf.mxu0
  %v201 = vpop.f32.mrf.mxu0
  %v202 = vadd.f32 %v143, %v201
  %v203 = vpop.f32.mrf.mxu0
  %204 = vdwg.mxu0
  %v205 = vmax.f32 %v191, 0.0
  %v206 = vmax.f32 %v194, 0.0
  %v207 = vmax.f32 %v199, 0.0
  %v208 = vmax.f32 %v202, 0.0
  %vm209 = vcmask 261120
  %210 = vst.msk [vmem:[%s6] sm:$0xff] %vm209, %v205
  %211 = vst.msk [vmem:[%s6 + $0x8] sm:$0xff] %vm209, %v206
  %212 = vst.msk [vmem:[%s6 + $0x10] sm:$0xff] %vm209, %v207
  %213 = vst.msk [vmem:[%s6 + $0x18] sm:$0xff] %vm209, %v208
  %v214 = vld [vmem:[%s4] sm:$0xf]
  %v215 = vld [vmem:[%s5] sm:$0x1]
  %v217 = vlaneseq
  %v218 = vshrl.u32 %v217, 7
  %v219 = vsub.s32 0, %v218
  %v220 = vrot.slane %v215, %v219
  %v223 = vsel %vm152, %v214, 0
  %225 = vmatprep.subr.bf16.mxu0 0
  %226 = vmatpush1.bf16.msra.mxu0 0
  %227 = vmatprep.subr.bf16.mxu0 0
  %228 = vmatpush1.bf16.msra.mxu0 0
  %229 = vmatprep.subr.bf16.mxu0 0
  %230 = vmatpush1.bf16.msra.mxu0 0
  %231 = vmatprep.subr.bf16.mxu0 0
  %232 = vmatpush1.bf16.msra.mxu0 0
  %233 = vmatprep.subr.bf16.mxu0 0
  %234 = vmatpush1.bf16.msra.mxu0 0
  %235 = vmatprep.subr.bf16.mxu0 0
  %236 = vmatpush1.bf16.msra.mxu0 0
  %237 = vmatprep.subr.bf16.mxu0 0
  %238 = vmatpush1.bf16.msra.mxu0 0
  %239 = vmatprep.subr.bf16.mxu0 0
  %240 = vmatpush1.bf16.msra.mxu0 %v223
  %241 = vmatprep.subr.bf16.mxu0 0
  %242 = vmatpush2.bf16.msra.mxu0 0
  %243 = vmatprep.subr.bf16.mxu0 0
  %244 = vmatpush2.bf16.msra.mxu0 0
  %245 = vmatprep.subr.bf16.mxu0 0
  %246 = vmatpush2.bf16.msra.mxu0 0
  %247 = vmatprep.subr.bf16.mxu0 0
  %248 = vmatpush2.bf16.msra.mxu0 0
  %249 = vmatprep.subr.bf16.mxu0 0
  %250 = vmatpush2.bf16.msra.mxu0 0
  %251 = vmatprep.subr.bf16.mxu0 0
  %252 = vmatpush2.bf16.msra.mxu0 0
  %253 = vmatprep.subr.bf16.mxu0 0
  %254 = vmatpush2.bf16.msra.mxu0 0
  %255 = vmatprep.subr.bf16.mxu0 0
  %256 = vmatpush2.bf16.msra.mxu0 0
  %257 = vmatprep.mubr.bf16.mxu0 0
  %258 = vmatmul.mubr.bf16.gmra.mxu0 %v147
  %v259 = vpop.f32.mrf.mxu0
  %v260 = vadd.f32 %v220, %v259
  %v261 = vpop.f32.mrf.mxu0
  %v262 = vpop.f32.mrf.mxu0
  %v263 = vadd.f32 %v220, %v262
  %v264 = vpop.f32.mrf.mxu0
  %265 = vmatprep.mubr.bf16.mxu0 0
  %266 = vmatmul.mubr.bf16.gmra.mxu0 %v150
  %v267 = vpop.f32.mrf.mxu0
  %v268 = vadd.f32 %v220, %v267
  %v269 = vpop.f32.mrf.mxu0
  %v270 = vpop.f32.mrf.mxu0
  %v271 = vadd.f32 %v220, %v270
  %v272 = vpop.f32.mrf.mxu0
  %273 = vdwg.mxu0
  %v274 = vmax.f32 %v260, 0.0
  %v275 = vmax.f32 %v263, 0.0
  %v276 = vmax.f32 %v268, 0.0
  %v277 = vmax.f32 %v271, 0.0
  %278 = vst.msk [vmem:[%s7] sm:$0xff] %vm41, %v274
  %279 = vst.msk [vmem:[%s7 + $0x8] sm:$0xff] %vm41, %v275
  %280 = vst.msk [vmem:[%s7 + $0x10] sm:$0xff] %vm41, %v276
  %281 = vst.msk [vmem:[%s7 + $0x18] sm:$0xff] %vm41, %v277
  // Predicated region
  $region26: #{soft_clustering_forward.3} parent=0 // pred_check
    _
  $region27: #{soft_clustering_forward.3} parent=0 // pred_check_branch
    %283 = sbr.rel (0) target = $region29
  $region28: #{soft_clustering_forward.3} parent=0 // pred_region
    _
  $region29: #{soft_clustering_forward.3} parent=0 // pred_fallthru
    _
  // Predicated region
  $region30: #{soft_clustering_forward.3} parent=0 // pred_check
    _
  $region31: #{soft_clustering_forward.3} parent=0 // pred_check_branch
    %285 = sbr.rel (0) target = $region33
  $region32: #{soft_clustering_forward.3} parent=0 // pred_region
    _
  $region33: #{soft_clustering_forward.3} parent=0 // pred_fallthru
    _
  // Predicated region
  $region34: #{soft_clustering_forward.3} parent=0 // pred_check
    _
  $region35: #{soft_clustering_forward.3} parent=0 // pred_check_branch
    %287 = sbr.rel (0) target = $region37
  $region36: #{soft_clustering_forward.3} parent=0 // pred_region
    _
  $region37: #{soft_clustering_forward.3} parent=0 // pred_fallthru
    _
  // Predicated region
  $region38: #{soft_clustering_forward.3} parent=0 // pred_check
    _
  $region39: #{soft_clustering_forward.3} parent=0 // pred_check_branch
    %289 = sbr.rel (0) target = $region41
  $region40: #{soft_clustering_forward.3} parent=0 // pred_region
    _
  $region41: #{soft_clustering_forward.3} parent=0 // pred_fallthru
    _

// kernel: soft_clustering_forward.4
$region0: #{soft_clustering_forward.4}
  #allocation0 [shape = 'u32[]', space=smem, size = 0x4, offset = 0x4, fixed_abs, tag = 'smem constant byte address 0x4 - core index']
  #allocation1 [shape = 'u32[144,128]{1,0:T(1,128)}', space=vmem, size = 0x12000, scoped, tag = 'internal scratch']
  %s0 = inlined_call_operand.vmem [shape: bf16[2,16,16], index: 0, kind: input, shape index: {}]
  %s1 = inlined_call_operand.vmem [shape: f32[2,16,32], index: 1, kind: input, shape index: {}]
  %s2 = inlined_call_operand.vmem [shape: f32[2,16,16], index: 2, kind: input, shape index: {}]
  %s3 = inlined_call_operand.vmem [shape: f32[1,32], index: 3, kind: input, shape index: {}]
  %s4 = inlined_call_operand.vmem [shape: f32[1,32], index: 4, kind: input, shape index: {}]
  %s5 = inlined_call_operand.vmem [shape: f32[1,16], index: 5, kind: input, shape index: {}]
  %s6 = inlined_call_operand.vmem [shape: f32[1,16], index: 6, kind: input, shape index: {}]
  %s7 = inlined_call_operand.vmem [shape: bf16[32,16], index: 7, kind: input, shape index: {}]
  %s8 = inlined_call_operand.vmem [shape: f32[1,16], index: 8, kind: input, shape index: {}]
  %s9 = inlined_call_operand.vmem [shape: bf16[16,8], index: 9, kind: input, shape index: {}]
  %s10 = inlined_call_operand.vmem [shape: f32[1,8], index: 10, kind: input, shape index: {}]
  %s11 = inlined_call_operand.vmem [shape: f32[2,16,16], index: 11, kind: output, shape index: {0}]
  %s12 = inlined_call_operand.vmem [shape: f32[2,16,8], index: 12, kind: output, shape index: {1}]
  %13 = xla_tuple %s11, %s12
  %s14 = sld [smem:[#allocation0]]
  $region62: #{soft_clustering_forward.4} parent=0
    _
  %s16 = ssub.s32 1, %s14
  %s17 = scalar_select 0, %s16, %s14
  // Predicated region
  $region2: #{soft_clustering_forward.4} parent=0 // pred_check
    _
  $region3: #{soft_clustering_forward.4} parent=0 // pred_check_branch
    %19 = sbr.rel (0) target = $region5
  $region4: #{soft_clustering_forward.4} parent=0 // pred_region
    _
  $region5: #{soft_clustering_forward.4} parent=0 // pred_fallthru
    _
  // Predicated region
  $region6: #{soft_clustering_forward.4} parent=0 // pred_check
    _
  $region7: #{soft_clustering_forward.4} parent=0 // pred_check_branch
    %21 = sbr.rel (0) target = $region9
  $region8: #{soft_clustering_forward.4} parent=0 // pred_region
    _
  $region9: #{soft_clustering_forward.4} parent=0 // pred_fallthru
    _
  // Predicated region
  $region10: #{soft_clustering_forward.4} parent=0 // pred_check
    _
  $region11: #{soft_clustering_forward.4} parent=0 // pred_check_branch
    %23 = sbr.rel (0) target = $region13
  $region12: #{soft_clustering_forward.4} parent=0 // pred_region
    _
  $region13: #{soft_clustering_forward.4} parent=0 // pred_fallthru
    _
  // Predicated region
  $region14: #{soft_clustering_forward.4} parent=0 // pred_check
    _
  $region15: #{soft_clustering_forward.4} parent=0 // pred_check_branch
    %25 = sbr.rel (0) target = $region17
  $region16: #{soft_clustering_forward.4} parent=0 // pred_region
    _
  $region17: #{soft_clustering_forward.4} parent=0 // pred_fallthru
    _
  // Predicated region
  $region18: #{soft_clustering_forward.4} parent=0 // pred_check
    _
  $region19: #{soft_clustering_forward.4} parent=0 // pred_check_branch
    %27 = sbr.rel (0) target = $region21
  $region20: #{soft_clustering_forward.4} parent=0 // pred_region
    _
  $region21: #{soft_clustering_forward.4} parent=0 // pred_fallthru
    _
  // Predicated region
  $region22: #{soft_clustering_forward.4} parent=0 // pred_check
    _
  $region23: #{soft_clustering_forward.4} parent=0 // pred_check_branch
    %29 = sbr.rel (0) target = $region25
  $region24: #{soft_clustering_forward.4} parent=0 // pred_region
    _
  $region25: #{soft_clustering_forward.4} parent=0 // pred_fallthru
    _
  // Predicated region
  $region26: #{soft_clustering_forward.4} parent=0 // pred_check
    _
  $region27: #{soft_clustering_forward.4} parent=0 // pred_check_branch
    %31 = sbr.rel (0) target = $region29
  $region28: #{soft_clustering_forward.4} parent=0 // pred_region
    _
  $region29: #{soft_clustering_forward.4} parent=0 // pred_fallthru
    _
  // Predicated region
  $region30: #{soft_clustering_forward.4} parent=0 // pred_check
    _
  $region31: #{soft_clustering_forward.4} parent=0 // pred_check_branch
    %33 = sbr.rel (0) target = $region33
  $region32: #{soft_clustering_forward.4} parent=0 // pred_region
    _
  $region33: #{soft_clustering_forward.4} parent=0 // pred_fallthru
    _
  // Predicated region
  $region34: #{soft_clustering_forward.4} parent=0 // pred_check
    _
  $region35: #{soft_clustering_forward.4} parent=0 // pred_check_branch
    %35 = sbr.rel (0) target = $region37
  $region36: #{soft_clustering_forward.4} parent=0 // pred_region
    _
  $region37: #{soft_clustering_forward.4} parent=0 // pred_fallthru
    _
  // Predicated region
  $region38: #{soft_clustering_forward.4} parent=0 // pred_check
    _
  $region39: #{soft_clustering_forward.4} parent=0 // pred_check_branch
    %37 = sbr.rel (0) target = $region41
  $region40: #{soft_clustering_forward.4} parent=0 // pred_region
    _
  $region41: #{soft_clustering_forward.4} parent=0 // pred_fallthru
    _
  // Predicated region
  $region42: #{soft_clustering_forward.4} parent=0 // pred_check
    _
  $region43: #{soft_clustering_forward.4} parent=0 // pred_check_branch
    %39 = sbr.rel (0) target = $region45
  $region44: #{soft_clustering_forward.4} parent=0 // pred_region
    _
  $region45: #{soft_clustering_forward.4} parent=0 // pred_fallthru
    _
  %v41 = vld [vmem:[%s0] sm:$0xf]
  %v42 = vld [vmem:[%s0 + $0x4] sm:$0xf]
  %v43 = vld [vmem:[%s0 + $0x8] sm:$0xf]
  %v44 = vld [vmem:[%s0 + $0xc] sm:$0xf]
  %v45 = vld [vmem:[%s1] sm:$0xff]
  %v46 = vld [vmem:[%s1 + $0x8] sm:$0xff]
  %v47 = vld [vmem:[%s1 + $0x10] sm:$0xff]
  %v48 = vld [vmem:[%s1 + $0x18] sm:$0xff]
  %v49 = vld [vmem:[%s3] sm:$0x1]
  %v51 = vlaneseq
  %v52 = vshrl.u32 %v51, 7
  %v53 = vsub.s32 0, %v52
  %v54 = vrot.slane %v49, %v53
  %v56 = vmul.f32 %v45, %v54
  %v57 = vmul.f32 %v46, %v54
  %v58 = vmul.f32 %v47, %v54
  %v59 = vmul.f32 %v48, %v54
  %v60 = vld [vmem:[%s4] sm:$0x1]
  %v62 = vlaneseq
  %v63 = vshrl.u32 %v62, 7
  %v64 = vsub.s32 0, %v63
  %v65 = vrot.slane %v60, %v64
  %v67 = vadd.f32 %v56, %v65
  %v68 = vadd.f32 %v57, %v65
  %v69 = vadd.f32 %v58, %v65
  %v70 = vadd.f32 %v59, %v65
  %v71 = vld [vmem:[%s2] sm:$0xff]
  %v72 = vld [vmem:[%s2 + $0x8] sm:$0xff]
  %v73 = vld [vmem:[%s2 + $0x10] sm:$0xff]
  %v74 = vld [vmem:[%s2 + $0x18] sm:$0xff]
  %v75 = vld [vmem:[%s5] sm:$0x1]
  %v77 = vlaneseq
  %v78 = vshrl.u32 %v77, 7
  %v79 = vsub.s32 0, %v78
  %v80 = vrot.slane %v75, %v79
  %v82 = vmul.f32 %v71, %v80
  %v83 = vmul.f32 %v72, %v80
  %v84 = vmul.f32 %v73, %v80
  %v85 = vmul.f32 %v74, %v80
  %v86 = vld [vmem:[%s6] sm:$0x1]
  %v88 = vlaneseq
  %v89 = vshrl.u32 %v88, 7
  %v90 = vsub.s32 0, %v89
  %v91 = vrot.slane %v86, %v90
  %v93 = vadd.f32 %v82, %v91
  %v94 = vadd.f32 %v83, %v91
  %v95 = vadd.f32 %v84, %v91
  %v96 = vadd.f32 %v85, %v91
  %v97 = vpack.c.bf16 %v68, %v67
  %v98 = vpack.c.bf16 %v70, %v69
  %v101 = vunpack.c.l.b16 %v41
  %v102 = vunpack.c.l.b16 %v42
  %v103 = vpack.c.b16 %v102, %v101
  %vm104 = vcmask 130048
  %v106 = vsel %vm104, %v103, 0
  %108 = vmatprep.subr.bf16.mxu0 0
  %109 = vmatpush1.bf16.msra.mxu0 0
  %110 = vmatprep.subr.bf16.mxu0 0
  %111 = vmatpush1.bf16.msra.mxu0 0
  %112 = vmatprep.subr.bf16.mxu0 0
  %113 = vmatpush1.bf16.msra.mxu0 0
  %114 = vmatprep.subr.bf16.mxu0 0
  %115 = vmatpush1.bf16.msra.mxu0 0
  %116 = vmatprep.subr.bf16.mxu0 0
  %117 = vmatpush1.bf16.msra.mxu0 0
  %118 = vmatprep.subr.bf16.mxu0 0
  %119 = vmatpush1.bf16.msra.mxu0 0
  %120 = vmatprep.subr.bf16.mxu0 0
  %121 = vmatpush1.bf16.msra.mxu0 0
  %122 = vmatprep.subr.bf16.mxu0 0
  %123 = vmatpush1.bf16.msra.mxu0 %v97
  %124 = vmatprep.subr.bf16.mxu0 0
  %125 = vmatpush2.bf16.msra.mxu0 0
  %126 = vmatprep.subr.bf16.mxu0 0
  %127 = vmatpush2.bf16.msra.mxu0 0
  %128 = vmatprep.subr.bf16.mxu0 0
  %129 = vmatpush2.bf16.msra.mxu0 0
  %130 = vmatprep.subr.bf16.mxu0 0
  %131 = vmatpush2.bf16.msra.mxu0 0
  %132 = vmatprep.subr.bf16.mxu0 0
  %133 = vmatpush2.bf16.msra.mxu0 0
  %134 = vmatprep.subr.bf16.mxu0 0
  %135 = vmatpush2.bf16.msra.mxu0 0
  %136 = vmatprep.subr.bf16.mxu0 0
  %137 = vmatpush2.bf16.msra.mxu0 0
  %138 = vmatprep.subr.bf16.mxu0 0
  %139 = vmatpush2.bf16.msra.mxu0 0
  %140 = vmatprep.mubr.bf16.mxu0 0
  %141 = vmatmul.mubr.bf16.gmra.mxu0 %v106
  %v142 = vpop.f32.mrf.mxu0
  %v143 = vadd.f32 %v67, %v142
  %v144 = vpop.f32.mrf.mxu0
  %v145 = vpop.f32.mrf.mxu0
  %v146 = vadd.f32 %v68, %v145
  %v147 = vpop.f32.mrf.mxu0
  %148 = vdwg.mxu0
  %v151 = vunpack.c.l.b16 %v43
  %v152 = vunpack.c.l.b16 %v44
  %v153 = vpack.c.b16 %v152, %v151
  %v155 = vsel %vm104, %v153, 0
  %157 = vmatprep.subr.bf16.mxu0 0
  %158 = vmatpush1.bf16.msra.mxu0 0
  %159 = vmatprep.subr.bf16.mxu0 0
  %160 = vmatpush1.bf16.msra.mxu0 0
  %161 = vmatprep.subr.bf16.mxu0 0
  %162 = vmatpush1.bf16.msra.mxu0 0
  %163 = vmatprep.subr.bf16.mxu0 0
  %164 = vmatpush1.bf16.msra.mxu0 0
  %165 = vmatprep.subr.bf16.mxu0 0
  %166 = vmatpush1.bf16.msra.mxu0 0
  %167 = vmatprep.subr.bf16.mxu0 0
  %168 = vmatpush1.bf16.msra.mxu0 0
  %169 = vmatprep.subr.bf16.mxu0 0
  %170 = vmatpush1.bf16.msra.mxu0 0
  %171 = vmatprep.subr.bf16.mxu0 0
  %172 = vmatpush1.bf16.msra.mxu0 %v98
  %173 = vmatprep.subr.bf16.mxu0 0
  %174 = vmatpush2.bf16.msra.mxu0 0
  %175 = vmatprep.subr.bf16.mxu0 0
  %176 = vmatpush2.bf16.msra.mxu0 0
  %177 = vmatprep.subr.bf16.mxu0 0
  %178 = vmatpush2.bf16.msra.mxu0 0
  %179 = vmatprep.subr.bf16.mxu0 0
  %180 = vmatpush2.bf16.msra.mxu0 0
  %181 = vmatprep.subr.bf16.mxu0 0
  %182 = vmatpush2.bf16.msra.mxu0 0
  %183 = vmatprep.subr.bf16.mxu0 0
  %184 = vmatpush2.bf16.msra.mxu0 0
  %185 = vmatprep.subr.bf16.mxu0 0
  %186 = vmatpush2.bf16.msra.mxu0 0
  %187 = vmatprep.subr.bf16.mxu0 0
  %188 = vmatpush2.bf16.msra.mxu0 0
  %189 = vmatprep.mubr.bf16.mxu0 0
  %190 = vmatmul.mubr.bf16.gmra.mxu0 %v155
  %v191 = vpop.f32.mrf.mxu0
  %v192 = vadd.f32 %v69, %v191
  %v193 = vpop.f32.mrf.mxu0
  %v194 = vpop.f32.mrf.mxu0
  %v195 = vadd.f32 %v70, %v194
  %v196 = vpop.f32.mrf.mxu0
  %197 = vdwg.mxu0
  %v198 = vpack.c.bf16 %v94, %v93
  %v199 = vpack.c.bf16 %v96, %v95
  %200 = vmatprep.subr.bf16.mxu0 0
  %201 = vmatpush1.bf16.msra.mxu0 0
  %202 = vmatprep.subr.bf16.mxu0 0
  %203 = vmatpush1.bf16.msra.mxu0 0
  %204 = vmatprep.subr.bf16.mxu0 0
  %205 = vmatpush1.bf16.msra.mxu0 0
  %206 = vmatprep.subr.bf16.mxu0 0
  %207 = vmatpush1.bf16.msra.mxu0 0
  %208 = vmatprep.subr.bf16.mxu0 0
  %209 = vmatpush1.bf16.msra.mxu0 0
  %210 = vmatprep.subr.bf16.mxu0 0
  %211 = vmatpush1.bf16.msra.mxu0 0
  %212 = vmatprep.subr.bf16.mxu0 0
  %213 = vmatpush1.bf16.msra.mxu0 0
  %214 = vmatprep.subr.bf16.mxu0 0
  %215 = vmatpush1.bf16.msra.mxu0 %v198
  %216 = vmatprep.subr.bf16.mxu0 0
  %217 = vmatpush2.bf16.msra.mxu0 0
  %218 = vmatprep.subr.bf16.mxu0 0
  %219 = vmatpush2.bf16.msra.mxu0 0
  %220 = vmatprep.subr.bf16.mxu0 0
  %221 = vmatpush2.bf16.msra.mxu0 0
  %222 = vmatprep.subr.bf16.mxu0 0
  %223 = vmatpush2.bf16.msra.mxu0 0
  %224 = vmatprep.subr.bf16.mxu0 0
  %225 = vmatpush2.bf16.msra.mxu0 0
  %226 = vmatprep.subr.bf16.mxu0 0
  %227 = vmatpush2.bf16.msra.mxu0 0
  %228 = vmatprep.subr.bf16.mxu0 0
  %229 = vmatpush2.bf16.msra.mxu0 0
  %230 = vmatprep.subr.bf16.mxu0 0
  %231 = vmatpush2.bf16.msra.mxu0 0
  %232 = vmatprep.mubr.bf16.mxu0 0
  %233 = vmatmul.mubr.bf16.gmra.mxu0 %v106
  %v234 = vpop.f32.mrf.mxu0
  %v235 = vadd.f32 %v93, %v234
  %v236 = vpop.f32.mrf.mxu0
  %v237 = vpop.f32.mrf.mxu0
  %v238 = vadd.f32 %v94, %v237
  %v239 = vpop.f32.mrf.mxu0
  %240 = vdwg.mxu0
  %241 = vmatprep.subr.bf16.mxu0 0
  %242 = vmatpush1.bf16.msra.mxu0 0
  %243 = vmatprep.subr.bf16.mxu0 0
  %244 = vmatpush1.bf16.msra.mxu0 0
  %245 = vmatprep.subr.bf16.mxu0 0
  %246 = vmatpush1.bf16.msra.mxu0 0
  %247 = vmatprep.subr.bf16.mxu0 0
  %248 = vmatpush1.bf16.msra.mxu0 0
  %249 = vmatprep.subr.bf16.mxu0 0
  %250 = vmatpush1.bf16.msra.mxu0 0
  %251 = vmatprep.subr.bf16.mxu0 0
  %252 = vmatpush1.bf16.msra.mxu0 0
  %253 = vmatprep.subr.bf16.mxu0 0
  %254 = vmatpush1.bf16.msra.mxu0 0
  %255 = vmatprep.subr.bf16.mxu0 0
  %256 = vmatpush1.bf16.msra.mxu0 %v199
  %257 = vmatprep.subr.bf16.mxu0 0
  %258 = vmatpush2.bf16.msra.mxu0 0
  %259 = vmatprep.subr.bf16.mxu0 0
  %260 = vmatpush2.bf16.msra.mxu0 0
  %261 = vmatprep.subr.bf16.mxu0 0
  %262 = vmatpush2.bf16.msra.mxu0 0
  %263 = vmatprep.subr.bf16.mxu0 0
  %264 = vmatpush2.bf16.msra.mxu0 0
  %265 = vmatprep.subr.bf16.mxu0 0
  %266 = vmatpush2.bf16.msra.mxu0 0
  %267 = vmatprep.subr.bf16.mxu0 0
  %268 = vmatpush2.bf16.msra.mxu0 0
  %269 = vmatprep.subr.bf16.mxu0 0
  %270 = vmatpush2.bf16.msra.mxu0 0
  %271 = vmatprep.subr.bf16.mxu0 0
  %272 = vmatpush2.bf16.msra.mxu0 0
  %273 = vmatprep.mubr.bf16.mxu0 0
  %274 = vmatmul.mubr.bf16.gmra.mxu0 %v155
  %v275 = vpop.f32.mrf.mxu0
  %v276 = vadd.f32 %v95, %v275
  %v277 = vpop.f32.mrf.mxu0
  %v278 = vpop.f32.mrf.mxu0
  %v279 = vadd.f32 %v96, %v278
  %v280 = vpop.f32.mrf.mxu0
  %281 = vdwg.mxu0
  %v282 = vpack.c.bf16 %v146, %v143
  %v283 = vpack.c.bf16 %v195, %v192
  %v284 = vld [vmem:[%s7] sm:$0xf]
  %v285 = vld [vmem:[%s7 + $0x4] sm:$0xf]
  %v286 = vld [vmem:[%s7 + $0x8] sm:$0xf]
  %v287 = vld [vmem:[%s7 + $0xc] sm:$0xf]
  %v288 = vld [vmem:[%s8] sm:$0x1]
  %v290 = vlaneseq
  %v291 = vshrl.u32 %v290, 7
  %v292 = vsub.s32 0, %v291
  %v293 = vrot.slane %v288, %v292
  %v299 = vunpack.c.l.b16 %v284
  %v300 = vunpack.c.l.b16 %v285
  %v301 = vunpack.c.l.b16 %v286
  %v302 = vunpack.c.l.b16 %v287
  %v303 = vpack.c.b16 %v300, %v299
  %v304 = vpack.c.b16 %v302, %v301
  %vm307 = vcmask 261120
  %v309 = vsel %vm307, %v282, 0
  %v312 = vsel %vm307, %v283, 0
  %314 = vmatprep.subr.bf16.mxu0 0
  %315 = vmatpush1.bf16.msra.mxu0 0
  %316 = vmatprep.subr.bf16.mxu0 0
  %317 = vmatpush1.bf16.msra.mxu0 0
  %318 = vmatprep.subr.bf16.mxu0 0
  %319 = vmatpush1.bf16.msra.mxu0 0
  %320 = vmatprep.subr.bf16.mxu0 0
  %321 = vmatpush1.bf16.msra.mxu0 0
  %322 = vmatprep.subr.bf16.mxu0 0
  %323 = vmatpush1.bf16.msra.mxu0 0
  %324 = vmatprep.subr.bf16.mxu0 0
  %325 = vmatpush1.bf16.msra.mxu0 0
  %326 = vmatprep.subr.bf16.mxu0 0
  %327 = vmatpush1.bf16.msra.mxu0 %v304
  %328 = vmatprep.subr.bf16.mxu0 0
  %329 = vmatpush1.bf16.msra.mxu0 %v303
  %330 = vmatprep.subr.bf16.mxu0 0
  %331 = vmatpush2.bf16.msra.mxu0 0
  %332 = vmatprep.subr.bf16.mxu0 0
  %333 = vmatpush2.bf16.msra.mxu0 0
  %334 = vmatprep.subr.bf16.mxu0 0
  %335 = vmatpush2.bf16.msra.mxu0 0
  %336 = vmatprep.subr.bf16.mxu0 0
  %337 = vmatpush2.bf16.msra.mxu0 0
  %338 = vmatprep.subr.bf16.mxu0 0
  %339 = vmatpush2.bf16.msra.mxu0 0
  %340 = vmatprep.subr.bf16.mxu0 0
  %341 = vmatpush2.bf16.msra.mxu0 0
  %342 = vmatprep.subr.bf16.mxu0 0
  %343 = vmatpush2.bf16.msra.mxu0 0
  %344 = vmatprep.subr.bf16.mxu0 0
  %345 = vmatpush2.bf16.msra.mxu0 0
  %346 = vmatprep.mubr.bf16.mxu0 0
  %347 = vmatmul.mubr.bf16.gmra.mxu0 %v309
  %v348 = vpop.f32.mrf.mxu0
  %v349 = vadd.f32 %v293, %v348
  %v350 = vpop.f32.mrf.mxu0
  %v351 = vpop.f32.mrf.mxu0
  %v352 = vadd.f32 %v293, %v351
  %v353 = vpop.f32.mrf.mxu0
  %354 = vmatprep.mubr.bf16.mxu0 0
  %355 = vmatmul.mubr.bf16.gmra.mxu0 %v312
  %v356 = vpop.f32.mrf.mxu0
  %v357 = vadd.f32 %v293, %v356
  %v358 = vpop.f32.mrf.mxu0
  %v359 = vpop.f32.mrf.mxu0
  %v360 = vadd.f32 %v293, %v359
  %v361 = vpop.f32.mrf.mxu0
  %362 = vdwg.mxu0
  %v363 = vmax.f32 %v349, 0.0
  %v364 = vmax.f32 %v352, 0.0
  %v365 = vmax.f32 %v357, 0.0
  %v366 = vmax.f32 %v360, 0.0
  %367 = vst.msk [vmem:[%s11] sm:$0xff] %vm104, %v363
  %368 = vst.msk [vmem:[%s11 + $0x8] sm:$0xff] %vm104, %v364
  %369 = vst.msk [vmem:[%s11 + $0x10] sm:$0xff] %vm104, %v365
  %370 = vst.msk [vmem:[%s11 + $0x18] sm:$0xff] %vm104, %v366
  %v371 = vpack.c.bf16 %v238, %v235
  %v372 = vpack.c.bf16 %v279, %v276
  %v373 = vld [vmem:[%s9] sm:$0xf]
  %v374 = vld [vmem:[%s9 + $0x4] sm:$0xf]
  %v375 = vld [vmem:[%s10] sm:$0x1]
  %v377 = vlaneseq
  %v378 = vshrl.u32 %v377, 7
  %v379 = vsub.s32 0, %v378
  %v380 = vrot.slane %v375, %v379
  %v384 = vunpack.c.l.b16 %v373
  %v385 = vunpack.c.l.b16 %v374
  %v386 = vpack.c.b16 %v385, %v384
  %v389 = vsel %vm104, %v371, 0
  %v392 = vsel %vm104, %v372, 0
  %394 = vmatprep.subr.bf16.mxu0 0
  %395 = vmatpush1.bf16.msra.mxu0 0
  %396 = vmatprep.subr.bf16.mxu0 0
  %397 = vmatpush1.bf16.msra.mxu0 0
  %398 = vmatprep.subr.bf16.mxu0 0
  %399 = vmatpush1.bf16.msra.mxu0 0
  %400 = vmatprep.subr.bf16.mxu0 0
  %401 = vmatpush1.bf16.msra.mxu0 0
  %402 = vmatprep.subr.bf16.mxu0 0
  %403 = vmatpush1.bf16.msra.mxu0 0
  %404 = vmatprep.subr.bf16.mxu0 0
  %405 = vmatpush1.bf16.msra.mxu0 0
  %406 = vmatprep.subr.bf16.mxu0 0
  %407 = vmatpush1.bf16.msra.mxu0 0
  %408 = vmatprep.subr.bf16.mxu0 0
  %409 = vmatpush1.bf16.msra.mxu0 %v386
  %410 = vmatprep.subr.bf16.mxu0 0
  %411 = vmatpush2.bf16.msra.mxu0 0
  %412 = vmatprep.subr.bf16.mxu0 0
  %413 = vmatpush2.bf16.msra.mxu0 0
  %414 = vmatprep.subr.bf16.mxu0 0
  %415 = vmatpush2.bf16.msra.mxu0 0
  %416 = vmatprep.subr.bf16.mxu0 0
  %417 = vmatpush2.bf16.msra.mxu0 0
  %418 = vmatprep.subr.bf16.mxu0 0
  %419 = vmatpush2.bf16.msra.mxu0 0
  %420 = vmatprep.subr.bf16.mxu0 0
  %421 = vmatpush2.bf16.msra.mxu0 0
  %422 = vmatprep.subr.bf16.mxu0 0
  %423 = vmatpush2.bf16.msra.mxu0 0
  %424 = vmatprep.subr.bf16.mxu0 0
  %425 = vmatpush2.bf16.msra.mxu0 0
  %426 = vmatprep.mubr.bf16.mxu0 0
  %427 = vmatmul.mubr.bf16.gmra.mxu0 %v389
  %v428 = vpop.f32.mrf.mxu0
  %v429 = vadd.f32 %v380, %v428
  %v430 = vpop.f32.mrf.mxu0
  %v431 = vpop.f32.mrf.mxu0
  %v432 = vadd.f32 %v380, %v431
  %v433 = vpop.f32.mrf.mxu0
  %434 = vmatprep.mubr.bf16.mxu0 0
  %435 = vmatmul.mubr.bf16.gmra.mxu0 %v392
  %v436 = vpop.f32.mrf.mxu0
  %v437 = vadd.f32 %v380, %v436
  %v438 = vpop.f32.mrf.mxu0
  %v439 = vpop.f32.mrf.mxu0
  %v440 = vadd.f32 %v380, %v439
  %v441 = vpop.f32.mrf.mxu0
  %442 = vdwg.mxu0
  %v443 = vmax.f32 %v429, 0.0
  %v444 = vmax.f32 %v432, 0.0
  %v445 = vmax.f32 %v437, 0.0
  %v446 = vmax.f32 %v440, 0.0
  %vm447 = vcmask 64512
  %448 = vst.msk [vmem:[%s12] sm:$0xff] %vm447, %v443
  %449 = vst.msk [vmem:[%s12 + $0x8] sm:$0xff] %vm447, %v444
  %450 = vst.msk [vmem:[%s12 + $0x10] sm:$0xff] %vm447, %v445
  %451 = vst.msk [vmem:[%s12 + $0x18] sm:$0xff] %vm447, %v446
  // Predicated region
  $region46: #{soft_clustering_forward.4} parent=0 // pred_check
    _
  $region47: #{soft_clustering_forward.4} parent=0 // pred_check_branch
    %453 = sbr.rel (0) target = $region49
  $region48: #{soft_clustering_forward.4} parent=0 // pred_region
    _
  $region49: #{soft_clustering_forward.4} parent=0 // pred_fallthru
    _
  // Predicated region
  $region50: #{soft_clustering_forward.4} parent=0 // pred_check
    _
  $region51: #{soft_clustering_forward.4} parent=0 // pred_check_branch
    %455 = sbr.rel (0) target = $region53
  $region52: #{soft_clustering_forward.4} parent=0 // pred_region
    _
  $region53: #{soft_clustering_forward.4} parent=0 // pred_fallthru
    _
  // Predicated region
  $region54: #{soft_clustering_forward.4} parent=0 // pred_check
    _
  $region55: #{soft_clustering_forward.4} parent=0 // pred_check_branch
    %457 = sbr.rel (0) target = $region57
  $region56: #{soft_clustering_forward.4} parent=0 // pred_region
    _
  $region57: #{soft_clustering_forward.4} parent=0 // pred_fallthru
    _
  // Predicated region
  $region58: #{soft_clustering_forward.4} parent=0 // pred_check
    _
  $region59: #{soft_clustering_forward.4} parent=0 // pred_check_branch
    %459 = sbr.rel (0) target = $region61
  $region60: #{soft_clustering_forward.4} parent=0 // pred_region
    _
  $region61: #{soft_clustering_forward.4} parent=0 // pred_fallthru
    _

</llo_original>
